<compile_context>
chip_gen: v5e
topology: v5e:2x2
jax: 0.10.0
libtpu: 0.0.40
codegen_flags: <defaults>
</compile_context>

<pallas_src>
import jax
import jax.numpy as jnp
from jax.experimental import pallas as pl
from jax.experimental.pallas import tpu as pltpu


# -----------------------------------------------------------------------------
# Single fused kernel: frame matmul -> serial T-LSTM -> tail.
# -----------------------------------------------------------------------------
def haku_l0_kernel(feats_ref, dt_ref, w_fused_ref, biav_ref, w_hh_ref,
                   w_t_ref, b_t_ref, w_tail_ref, b_tail_ref, out_ref, gx_ref):
    T, Bp, _ = dt_ref.shape
    H = w_hh_ref.shape[0]

    # ---- Phase 1 (non-recurrent): one lane-dense MXU matmul over all frames.
    # gx = ReLU(feats) @ (W_lc @ W_ih) + (biav + b_lc @ W_ih)   -> (T*Bp, 4H)
    x = jnp.maximum(feats_ref[...], 0.0)
    gx_ref[...] = (jnp.dot(x, w_fused_ref[...],
                           preferred_element_type=jnp.float32)
                   + biav_ref[...])
    # TODO(synk): on v6e/v7x at realistic frame counts cast the Phase-1 matmul
    # inputs to bf16 (kept f32 here to preserve tight tolerances at toy sizes).

    # ---- Loop-invariant weight loads: held in vregs across the recurrence.
    w_hh = w_hh_ref[...]          # (H, 4H)  fused recurrent weight
    w_t = w_t_ref[...]            # (H, H)   time-decay projection
    b_t = b_t_ref[...]            # (1, H)

    def gate_acts(gates):
        # gates: (Bp, 4H) lane-dense, gate order [f | i | o | g].
        fio = jax.nn.sigmoid(gates[:, :3 * H])   # one EUP pass over 3 gates
        g = jnp.tanh(gates[:, 3 * H:])
        return fio[:, :H], fio[:, H:2 * H], fio[:, 2 * H:], g

    # ---- Peeled t = 0: h0 = c0 = 0, so both recurrent dots are identically 0.
    gx0 = gx_ref[:Bp, :]                                    # (Bp, 4H)
    f0, i0, o0, g0 = gate_acts(gx0)
    c_adj0 = jnp.tanh(b_t) * (dt_ref[0] - 1.0)              # (Bp, H)
    c1 = f0 * c_adj0 + i0 * g0
    h1 = o0 * jnp.tanh(c1)

    # ---- t = 1 .. T-1: irreducibly serial; 2 small independent MXU dots/step.
    def step(t, carry):
        h_t, c_t = carry
        row = pl.multiple_of(t * Bp, Bp)                    # sublane-aligned
        gx_t = gx_ref[pl.ds(row, Bp), :]                    # (Bp, 4H) full-lane
        gates = gx_t + jnp.dot(h_t, w_hh,
                               preferred_element_type=jnp.float32)
        c_s1 = jnp.tanh(jnp.dot(c_t, w_t,
                                preferred_element_type=jnp.float32) + b_t)
        c_adj = c_t + c_s1 * (dt_ref[t] - 1.0)              # c - c_s1 + c_s1*dt
        f_t, i_t, o_t, g_t = gate_acts(gates)
        c_new = f_t * c_adj + i_t * g_t
        h_new = o_t * jnp.tanh(c_new)
        return h_new, c_new

    h_T, _ = jax.lax.fori_loop(1, T, step, (h1, c1),
                               unroll=max(1, min(8, T - 1)))

    # ---- Tail: Dropout (identity in eval) -> ReLU -> Linear(H, 2). Epilogue
    # only, so its narrow (Bp, 2) store never touches the recurrent path.
    out_ref[...] = (jnp.dot(jnp.maximum(h_T, 0.0), w_tail_ref[...],
                            preferred_element_type=jnp.float32)
                    + b_tail_ref[...])


def haku_l0_pallas(feats, t_intervals, params):
    """feats: (T, B, 512) f32; t_intervals: (B, T) f32 -> (B, 2) f32."""
    T, B, F = feats.shape
    H = params["w_hh"].shape[0]
    Bp = ((B + 7) // 8) * 8                 # pad batch to the f32 sublane tile

    # --- param prep: fold the frame-side weights (loop-invariant algebra) ----
    hi = jax.lax.Precision.HIGHEST
    w_fused = jnp.dot(params["w_lc"], params["w_ih"], precision=hi)     # (512,4H)
    biav_fused = params["biav"] + jnp.dot(params["b_lc"], params["w_ih"],
                                          precision=hi)                 # (1,4H)

    # --- layout prep: zero-pad batch; remaining reshapes are free ------------
    if Bp != B:
        feats = jnp.pad(feats, ((0, 0), (0, Bp - B), (0, 0)))
        t_intervals = jnp.pad(t_intervals, ((0, Bp - B), (0, 0)))
    feats_flat = feats.reshape(T * Bp, F)                               # free
    dt = jnp.transpose(t_intervals, (1, 0))[:, :, None].astype(jnp.float32)
    # dt: (T, Bp, 1) — broadcast against (Bp, H) in-register inside the kernel.

    vmem = pl.BlockSpec(memory_space=pltpu.MemorySpace.VMEM)
    out = pl.pallas_call(
        haku_l0_kernel,
        out_shape=jax.ShapeDtypeStruct((Bp, 2), jnp.float32),
        in_specs=[vmem] * 9,
        out_specs=vmem,
        scratch_shapes=[pltpu.VMEM((T * Bp, 4 * H), jnp.float32)],
    )(feats_flat, dt, w_fused, biav_fused, params["w_hh"], params["w_t"],
      params["b_t"], params["w_tail"], params["b_tail"])
    return out[:B]


# -----------------------------------------------------------------------------
# Pure-JAX reference (same math as the PyTorch forward) for correctness check.
# -----------------------------------------------------------------------------
def haku_l0_ref(feats, t_intervals, params):
    T, B, _ = feats.shape
    H = params["w_hh"].shape[0]
    h_t = jnp.zeros((B, H), jnp.float32)
    c_t = jnp.zeros((B, H), jnp.float32)
    for t in range(T):
        x_t = jnp.maximum(feats[t], 0.0) @ params["w_lc"] + params["b_lc"]
        c_s1 = jnp.tanh(c_t @ params["w_t"] + params["b_t"])
        c_s2 = c_s1 * t_intervals[:, t:t + 1]
        c_adj = (c_t - c_s1) + c_s2
        gates = x_t @ params["w_ih"] + h_t @ params["w_hh"] + params["biav"]
        f_t = jax.nn.sigmoid(gates[:, 0 * H:1 * H])
        i_t = jax.nn.sigmoid(gates[:, 1 * H:2 * H])
        o_t = jax.nn.sigmoid(gates[:, 2 * H:3 * H])
        g_t = jnp.tanh(gates[:, 3 * H:4 * H])
        c_t = f_t * c_adj + i_t * g_t
        h_t = o_t * jnp.tanh(c_t)
    return jnp.maximum(h_t, 0.0) @ params["w_tail"] + params["b_tail"]


# -----------------------------------------------------------------------------
# Deterministic parameter construction (mirrors init_weights where specified).
# -----------------------------------------------------------------------------
def make_params(key, rnn_input=32, rnn_hidden=32):
    ks = jax.random.split(key, 8)
    F = 512
    H = rnn_hidden
    # W_ih: kaiming normal
    w_ih = jax.random.normal(ks[0], (rnn_input, 4 * H), jnp.float32) * jnp.sqrt(
        2.0 / rnn_input)
    # W_hh: orthogonal (QR of a gaussian)
    q, _ = jnp.linalg.qr(jax.random.normal(ks[1], (4 * H, H), jnp.float32))
    w_hh = q.T.astype(jnp.float32)                 # (H, 4H), orthonormal rows
    biav = jnp.zeros((1, 4 * H), jnp.float32)
    # W_t linear: uniform [0, 1) weights (as in init_weights), default-ish bias
    w_t = jax.random.uniform(ks[2], (H, H), jnp.float32)
    b_t = jax.random.uniform(ks[3], (1, H), jnp.float32,
                             -1.0 / jnp.sqrt(H), 1.0 / jnp.sqrt(H))
    # cnn_lc Linear(512, 32): default torch-style uniform
    w_lc = jax.random.uniform(ks[4], (F, 32), jnp.float32,
                              -1.0 / jnp.sqrt(F), 1.0 / jnp.sqrt(F))
    b_lc = jax.random.uniform(ks[5], (1, 32), jnp.float32,
                              -1.0 / jnp.sqrt(F), 1.0 / jnp.sqrt(F))
    # tail Linear(H, 2)
    w_tail = jax.random.uniform(ks[6], (H, 2), jnp.float32,
                                -1.0 / jnp.sqrt(H), 1.0 / jnp.sqrt(H))
    b_tail = jax.random.uniform(ks[7], (1, 2), jnp.float32,
                                -1.0 / jnp.sqrt(H), 1.0 / jnp.sqrt(H))
    return dict(w_ih=w_ih, w_hh=w_hh, biav=biav, w_t=w_t, b_t=b_t,
                w_lc=w_lc, b_lc=b_lc, w_tail=w_tail, b_tail=b_tail)


def backbone_features(x, key):
    """Stand-in for tora_3dresnet: deterministic linear projection to 512-d.
    x: (B, T, D, H, W) -> feats: (T, B, 512)."""
    B, T, D, Hh, W = x.shape
    flat = x.reshape(B, T, D * Hh * W)
    w_feat = jax.random.normal(key, (D * Hh * W, 512), jnp.float32) * 0.05
    feats = jnp.einsum("btf,fk->btk", flat, w_feat)
    return jnp.transpose(feats, (1, 0, 2)).astype(jnp.float32)   # (T, B, 512)


if __name__ == "__main__":
    key = jax.random.PRNGKey(0)
    k_x, k_t, k_p, k_bb = jax.random.split(key, 4)

    B, T, D, Hh, W = 2, 8, 4, 8, 8          # small video clip: (B, T, D, H, W)
    rnn_input, rnn_hidden = 32, 32

    x = jax.random.normal(k_x, (B, T, D, Hh, W), jnp.float32)
    t_intervals = jax.random.uniform(k_t, (B, T), jnp.float32)

    params = make_params(k_p, rnn_input, rnn_hidden)
    feats = backbone_features(x, k_bb)       # plain-JAX glue (backbone stand-in)

    out = haku_l0_pallas(feats, t_intervals, params)
    out = jax.block_until_ready(out)

    ref = haku_l0_ref(feats, t_intervals, params)
    assert out.shape == (B, 2)
    assert jnp.allclose(out, ref, atol=5e-4, rtol=5e-4), (out, ref)

    print("KERNEL_OK")
</pallas_src>

<mosaic_0001>
module attributes {stable_mosaic.version = 11 : i64} {
  func.func @haku_l0_kernel(%arg0: memref<64x512xf32, #tpu.memory_space<vmem>>, %arg1: memref<8x8x1xf32, #tpu.memory_space<vmem>>, %arg2: memref<512x128xf32, #tpu.memory_space<vmem>>, %arg3: memref<1x128xf32, #tpu.memory_space<vmem>>, %arg4: memref<32x128xf32, #tpu.memory_space<vmem>>, %arg5: memref<32x32xf32, #tpu.memory_space<vmem>>, %arg6: memref<1x32xf32, #tpu.memory_space<vmem>>, %arg7: memref<32x2xf32, #tpu.memory_space<vmem>>, %arg8: memref<1x2xf32, #tpu.memory_space<vmem>>, %arg9: memref<8x2xf32, #tpu.memory_space<vmem>>, %arg10: memref<64x128xf32, #tpu.memory_space<vmem>>) attributes {dimension_semantics = [], scalar_prefetch = 0 : i64, scratch_operands = 1 : i64, tpu.core_type = #tpu.core_type<tc>} {
    %c0 = arith.constant 0 : index
    %c0_0 = arith.constant 0 : index
    %0 = vector.load %arg0[%c0, %c0_0] : memref<64x512xf32, #tpu.memory_space<vmem>>, vector<64x512xf32>
    %cst = arith.constant 0.000000e+00 : f32
    %1 = vector.broadcast %cst : f32 to vector<64x512xf32>
    %2 = arith.maximumf %0, %1 : vector<64x512xf32>
    %c0_1 = arith.constant 0 : index
    %c0_2 = arith.constant 0 : index
    %3 = vector.load %arg2[%c0_1, %c0_2] : memref<512x128xf32, #tpu.memory_space<vmem>>, vector<512x128xf32>
    %cst_3 = arith.constant dense<0.000000e+00> : vector<64x128xf32>
    %4 = tpu.matmul %2, %3, %cst_3 {dimension_numbers = #tpu.dot_dimension_numbers<[1], [0], [0], [1], [0, 0, 1, 1], [], []>} : vector<64x512xf32>, vector<512x128xf32>, vector<64x128xf32> -> vector<64x128xf32>
    %c0_4 = arith.constant 0 : index
    %c0_5 = arith.constant 0 : index
    %5 = vector.load %arg3[%c0_4, %c0_5] : memref<1x128xf32, #tpu.memory_space<vmem>>, vector<1x128xf32>
    %6 = vector.broadcast %5 : vector<1x128xf32> to vector<64x128xf32>
    %7 = arith.addf %4, %6 : vector<64x128xf32>
    %c0_6 = arith.constant 0 : index
    %c0_7 = arith.constant 0 : index
    %8 = vector.load %arg10[%c0_6, %c0_7] : memref<64x128xf32, #tpu.memory_space<vmem>>, vector<64x128xf32>
    tpu.vector_store %arg10[%c0_6, %c0_7], %7 {strides = array<i32>} : memref<64x128xf32, #tpu.memory_space<vmem>>, vector<64x128xf32>,
    %c0_8 = arith.constant 0 : index
    %c0_9 = arith.constant 0 : index
    %9 = vector.load %arg4[%c0_8, %c0_9] : memref<32x128xf32, #tpu.memory_space<vmem>>, vector<32x128xf32>
    %c0_10 = arith.constant 0 : index
    %c0_11 = arith.constant 0 : index
    %10 = vector.load %arg5[%c0_10, %c0_11] : memref<32x32xf32, #tpu.memory_space<vmem>>, vector<32x32xf32>
    %c0_12 = arith.constant 0 : index
    %c0_13 = arith.constant 0 : index
    %11 = vector.load %arg6[%c0_12, %c0_13] : memref<1x32xf32, #tpu.memory_space<vmem>>, vector<1x32xf32>
    %c0_14 = arith.constant 0 : index
    %c0_15 = arith.constant 0 : index
    %12 = vector.load %arg10[%c0_14, %c0_15] : memref<64x128xf32, #tpu.memory_space<vmem>>, vector<8x128xf32>
    %13 = vector.extract_strided_slice %12 {offsets = [0, 0], sizes = [8, 96], strides = [1, 1]} : vector<8x128xf32> to vector<8x96xf32>
    %14 = arith.negf %13 : vector<8x96xf32>
    %15 = math.exp %14 : vector<8x96xf32>
    %cst_16 = arith.constant 1.000000e+00 : f32
    %16 = vector.broadcast %cst_16 : f32 to vector<8x96xf32>
    %17 = arith.addf %16, %15 : vector<8x96xf32>
    %18 = arith.divf %16, %17 : vector<8x96xf32>
    %19 = vector.extract_strided_slice %12 {offsets = [0, 96], sizes = [8, 32], strides = [1, 1]} : vector<8x128xf32> to vector<8x32xf32>
    %20 = math.tanh %19 : vector<8x32xf32>
    %21 = vector.extract_strided_slice %18 {offsets = [0, 0], sizes = [8, 32], strides = [1, 1]} : vector<8x96xf32> to vector<8x32xf32>
    %22 = vector.extract_strided_slice %18 {offsets = [0, 32], sizes = [8, 32], strides = [1, 1]} : vector<8x96xf32> to vector<8x32xf32>
    %23 = vector.extract_strided_slice %18 {offsets = [0, 64], sizes = [8, 32], strides = [1, 1]} : vector<8x96xf32> to vector<8x32xf32>
    %24 = math.tanh %11 : vector<1x32xf32>
    %c0_17 = arith.constant 0 : index
    %c0_18 = arith.constant 0 : index
    %c0_19 = arith.constant 0 : index
    %25 = vector.load %arg1[%c0_17, %c0_18, %c0_19] : memref<8x8x1xf32, #tpu.memory_space<vmem>>, vector<1x8x1xf32>
    %26 = vector.shape_cast %25 : vector<1x8x1xf32> to vector<8x1xf32>
    %cst_20 = arith.constant 1.000000e+00 : f32
    %27 = vector.broadcast %cst_20 : f32 to vector<8x1xf32>
    %28 = arith.subf %26, %27 : vector<8x1xf32>
    %29 = vector.broadcast %24 : vector<1x32xf32> to vector<8x32xf32>
    %30 = vector.broadcast %28 : vector<8x1xf32> to vector<8x32xf32>
    %31 = arith.mulf %29, %30 : vector<8x32xf32>
    %32 = arith.mulf %21, %31 : vector<8x32xf32>
    %33 = arith.mulf %22, %20 : vector<8x32xf32>
    %34 = arith.addf %32, %33 : vector<8x32xf32>
    %35 = math.tanh %34 : vector<8x32xf32>
    %36 = arith.mulf %23, %35 : vector<8x32xf32>
    %c1_i32 = arith.constant 1 : i32
    %c8_i32 = arith.constant 8 : i32
    %37 = arith.muli %c1_i32, %c8_i32 : i32
    %38 = tpu.assume_multiple %37, 8 : i32
    %39 = arith.index_cast %38 : i32 to index
    %c0_21 = arith.constant 0 : index
    %40 = vector.load %arg10[%39, %c0_21] : memref<64x128xf32, #tpu.memory_space<vmem>>, vector<8x128xf32>
    %cst_22 = arith.constant dense<0.000000e+00> : vector<8x128xf32>
    %41 = tpu.matmul %36, %9, %cst_22 {dimension_numbers = #tpu.dot_dimension_numbers<[1], [0], [0], [1], [0, 0, 1, 1], [], []>} : vector<8x32xf32>, vector<32x128xf32>, vector<8x128xf32> -> vector<8x128xf32>
    %42 = arith.addf %40, %41 : vector<8x128xf32>
    %cst_23 = arith.constant dense<0.000000e+00> : vector<8x32xf32>
    %43 = tpu.matmul %34, %10, %cst_23 {dimension_numbers = #tpu.dot_dimension_numbers<[1], [0], [0], [1], [0, 0, 1, 1], [], []>} : vector<8x32xf32>, vector<32x32xf32>, vector<8x32xf32> -> vector<8x32xf32>
    %44 = vector.broadcast %11 : vector<1x32xf32> to vector<8x32xf32>
    %45 = arith.addf %43, %44 : vector<8x32xf32>
    %46 = math.tanh %45 : vector<8x32xf32>
    %47 = arith.index_cast %c1_i32 : i32 to index
    %c0_24 = arith.constant 0 : index
    %c0_25 = arith.constant 0 : index
    %48 = vector.load %arg1[%47, %c0_24, %c0_25] : memref<8x8x1xf32, #tpu.memory_space<vmem>>, vector<1x8x1xf32>
    %49 = vector.shape_cast %48 : vector<1x8x1xf32> to vector<8x1xf32>
    %cst_26 = arith.constant 1.000000e+00 : f32
    %50 = vector.broadcast %cst_26 : f32 to vector<8x1xf32>
    %51 = arith.subf %49, %50 : vector<8x1xf32>
    %52 = vector.broadcast %51 : vector<8x1xf32> to vector<8x32xf32>
    %53 = arith.mulf %46, %52 : vector<8x32xf32>
    %54 = arith.addf %34, %53 : vector<8x32xf32>
    %55 = vector.extract_strided_slice %42 {offsets = [0, 0], sizes = [8, 96], strides = [1, 1]} : vector<8x128xf32> to vector<8x96xf32>
    %56 = arith.negf %55 : vector<8x96xf32>
    %57 = math.exp %56 : vector<8x96xf32>
    %cst_27 = arith.constant 1.000000e+00 : f32
    %58 = vector.broadcast %cst_27 : f32 to vector<8x96xf32>
    %59 = arith.addf %58, %57 : vector<8x96xf32>
    %60 = arith.divf %58, %59 : vector<8x96xf32>
    %61 = vector.extract_strided_slice %42 {offsets = [0, 96], sizes = [8, 32], strides = [1, 1]} : vector<8x128xf32> to vector<8x32xf32>
    %62 = math.tanh %61 : vector<8x32xf32>
    %63 = vector.extract_strided_slice %60 {offsets = [0, 0], sizes = [8, 32], strides = [1, 1]} : vector<8x96xf32> to vector<8x32xf32>
    %64 = vector.extract_strided_slice %60 {offsets = [0, 32], sizes = [8, 32], strides = [1, 1]} : vector<8x96xf32> to vector<8x32xf32>
    %65 = vector.extract_strided_slice %60 {offsets = [0, 64], sizes = [8, 32], strides = [1, 1]} : vector<8x96xf32> to vector<8x32xf32>
    %66 = arith.mulf %63, %54 : vector<8x32xf32>
    %67 = arith.mulf %64, %62 : vector<8x32xf32>
    %68 = arith.addf %66, %67 : vector<8x32xf32>
    %69 = math.tanh %68 : vector<8x32xf32>
    %70 = arith.mulf %65, %69 : vector<8x32xf32>
    %c2_i32 = arith.constant 2 : i32
    %c8_i32_28 = arith.constant 8 : i32
    %71 = arith.muli %c2_i32, %c8_i32_28 : i32
    %72 = tpu.assume_multiple %71, 8 : i32
    %73 = arith.index_cast %72 : i32 to index
    %c0_29 = arith.constant 0 : index
    %74 = vector.load %arg10[%73, %c0_29] : memref<64x128xf32, #tpu.memory_space<vmem>>, vector<8x128xf32>
    %cst_30 = arith.constant dense<0.000000e+00> : vector<8x128xf32>
    %75 = tpu.matmul %70, %9, %cst_30 {dimension_numbers = #tpu.dot_dimension_numbers<[1], [0], [0], [1], [0, 0, 1, 1], [], []>} : vector<8x32xf32>, vector<32x128xf32>, vector<8x128xf32> -> vector<8x128xf32>
    %76 = arith.addf %74, %75 : vector<8x128xf32>
    %cst_31 = arith.constant dense<0.000000e+00> : vector<8x32xf32>
    %77 = tpu.matmul %68, %10, %cst_31 {dimension_numbers = #tpu.dot_dimension_numbers<[1], [0], [0], [1], [0, 0, 1, 1], [], []>} : vector<8x32xf32>, vector<32x32xf32>, vector<8x32xf32> -> vector<8x32xf32>
    %78 = vector.broadcast %11 : vector<1x32xf32> to vector<8x32xf32>
    %79 = arith.addf %77, %78 : vector<8x32xf32>
    %80 = math.tanh %79 : vector<8x32xf32>
    %81 = arith.index_cast %c2_i32 : i32 to index
    %c0_32 = arith.constant 0 : index
    %c0_33 = arith.constant 0 : index
    %82 = vector.load %arg1[%81, %c0_32, %c0_33] : memref<8x8x1xf32, #tpu.memory_space<vmem>>, vector<1x8x1xf32>
    %83 = vector.shape_cast %82 : vector<1x8x1xf32> to vector<8x1xf32>
    %cst_34 = arith.constant 1.000000e+00 : f32
    %84 = vector.broadcast %cst_34 : f32 to vector<8x1xf32>
    %85 = arith.subf %83, %84 : vector<8x1xf32>
    %86 = vector.broadcast %85 : vector<8x1xf32> to vector<8x32xf32>
    %87 = arith.mulf %80, %86 : vector<8x32xf32>
    %88 = arith.addf %68, %87 : vector<8x32xf32>
    %89 = vector.extract_strided_slice %76 {offsets = [0, 0], sizes = [8, 96], strides = [1, 1]} : vector<8x128xf32> to vector<8x96xf32>
    %90 = arith.negf %89 : vector<8x96xf32>
    %91 = math.exp %90 : vector<8x96xf32>
    %cst_35 = arith.constant 1.000000e+00 : f32
    %92 = vector.broadcast %cst_35 : f32 to vector<8x96xf32>
    %93 = arith.addf %92, %91 : vector<8x96xf32>
    %94 = arith.divf %92, %93 : vector<8x96xf32>
    %95 = vector.extract_strided_slice %76 {offsets = [0, 96], sizes = [8, 32], strides = [1, 1]} : vector<8x128xf32> to vector<8x32xf32>
    %96 = math.tanh %95 : vector<8x32xf32>
    %97 = vector.extract_strided_slice %94 {offsets = [0, 0], sizes = [8, 32], strides = [1, 1]} : vector<8x96xf32> to vector<8x32xf32>
    %98 = vector.extract_strided_slice %94 {offsets = [0, 32], sizes = [8, 32], strides = [1, 1]} : vector<8x96xf32> to vector<8x32xf32>
    %99 = vector.extract_strided_slice %94 {offsets = [0, 64], sizes = [8, 32], strides = [1, 1]} : vector<8x96xf32> to vector<8x32xf32>
    %100 = arith.mulf %97, %88 : vector<8x32xf32>
    %101 = arith.mulf %98, %96 : vector<8x32xf32>
    %102 = arith.addf %100, %101 : vector<8x32xf32>
    %103 = math.tanh %102 : vector<8x32xf32>
    %104 = arith.mulf %99, %103 : vector<8x32xf32>
    %c3_i32 = arith.constant 3 : i32
    %c8_i32_36 = arith.constant 8 : i32
    %105 = arith.muli %c3_i32, %c8_i32_36 : i32
    %106 = tpu.assume_multiple %105, 8 : i32
    %107 = arith.index_cast %106 : i32 to index
    %c0_37 = arith.constant 0 : index
    %108 = vector.load %arg10[%107, %c0_37] : memref<64x128xf32, #tpu.memory_space<vmem>>, vector<8x128xf32>
    %cst_38 = arith.constant dense<0.000000e+00> : vector<8x128xf32>
    %109 = tpu.matmul %104, %9, %cst_38 {dimension_numbers = #tpu.dot_dimension_numbers<[1], [0], [0], [1], [0, 0, 1, 1], [], []>} : vector<8x32xf32>, vector<32x128xf32>, vector<8x128xf32> -> vector<8x128xf32>
    %110 = arith.addf %108, %109 : vector<8x128xf32>
    %cst_39 = arith.constant dense<0.000000e+00> : vector<8x32xf32>
    %111 = tpu.matmul %102, %10, %cst_39 {dimension_numbers = #tpu.dot_dimension_numbers<[1], [0], [0], [1], [0, 0, 1, 1], [], []>} : vector<8x32xf32>, vector<32x32xf32>, vector<8x32xf32> -> vector<8x32xf32>
    %112 = vector.broadcast %11 : vector<1x32xf32> to vector<8x32xf32>
    %113 = arith.addf %111, %112 : vector<8x32xf32>
    %114 = math.tanh %113 : vector<8x32xf32>
    %115 = arith.index_cast %c3_i32 : i32 to index
    %c0_40 = arith.constant 0 : index
    %c0_41 = arith.constant 0 : index
    %116 = vector.load %arg1[%115, %c0_40, %c0_41] : memref<8x8x1xf32, #tpu.memory_space<vmem>>, vector<1x8x1xf32>
    %117 = vector.shape_cast %116 : vector<1x8x1xf32> to vector<8x1xf32>
    %cst_42 = arith.constant 1.000000e+00 : f32
    %118 = vector.broadcast %cst_42 : f32 to vector<8x1xf32>
    %119 = arith.subf %117, %118 : vector<8x1xf32>
    %120 = vector.broadcast %119 : vector<8x1xf32> to vector<8x32xf32>
    %121 = arith.mulf %114, %120 : vector<8x32xf32>
    %122 = arith.addf %102, %121 : vector<8x32xf32>
    %123 = vector.extract_strided_slice %110 {offsets = [0, 0], sizes = [8, 96], strides = [1, 1]} : vector<8x128xf32> to vector<8x96xf32>
    %124 = arith.negf %123 : vector<8x96xf32>
    %125 = math.exp %124 : vector<8x96xf32>
    %cst_43 = arith.constant 1.000000e+00 : f32
    %126 = vector.broadcast %cst_43 : f32 to vector<8x96xf32>
    %127 = arith.addf %126, %125 : vector<8x96xf32>
    %128 = arith.divf %126, %127 : vector<8x96xf32>
    %129 = vector.extract_strided_slice %110 {offsets = [0, 96], sizes = [8, 32], strides = [1, 1]} : vector<8x128xf32> to vector<8x32xf32>
    %130 = math.tanh %129 : vector<8x32xf32>
    %131 = vector.extract_strided_slice %128 {offsets = [0, 0], sizes = [8, 32], strides = [1, 1]} : vector<8x96xf32> to vector<8x32xf32>
    %132 = vector.extract_strided_slice %128 {offsets = [0, 32], sizes = [8, 32], strides = [1, 1]} : vector<8x96xf32> to vector<8x32xf32>
    %133 = vector.extract_strided_slice %128 {offsets = [0, 64], sizes = [8, 32], strides = [1, 1]} : vector<8x96xf32> to vector<8x32xf32>
    %134 = arith.mulf %131, %122 : vector<8x32xf32>
    %135 = arith.mulf %132, %130 : vector<8x32xf32>
    %136 = arith.addf %134, %135 : vector<8x32xf32>
    %137 = math.tanh %136 : vector<8x32xf32>
    %138 = arith.mulf %133, %137 : vector<8x32xf32>
    %c4_i32 = arith.constant 4 : i32
    %c8_i32_44 = arith.constant 8 : i32
    %139 = arith.muli %c4_i32, %c8_i32_44 : i32
    %140 = tpu.assume_multiple %139, 8 : i32
    %141 = arith.index_cast %140 : i32 to index
    %c0_45 = arith.constant 0 : index
    %142 = vector.load %arg10[%141, %c0_45] : memref<64x128xf32, #tpu.memory_space<vmem>>, vector<8x128xf32>
    %cst_46 = arith.constant dense<0.000000e+00> : vector<8x128xf32>
    %143 = tpu.matmul %138, %9, %cst_46 {dimension_numbers = #tpu.dot_dimension_numbers<[1], [0], [0], [1], [0, 0, 1, 1], [], []>} : vector<8x32xf32>, vector<32x128xf32>, vector<8x128xf32> -> vector<8x128xf32>
    %144 = arith.addf %142, %143 : vector<8x128xf32>
    %cst_47 = arith.constant dense<0.000000e+00> : vector<8x32xf32>
    %145 = tpu.matmul %136, %10, %cst_47 {dimension_numbers = #tpu.dot_dimension_numbers<[1], [0], [0], [1], [0, 0, 1, 1], [], []>} : vector<8x32xf32>, vector<32x32xf32>, vector<8x32xf32> -> vector<8x32xf32>
    %146 = vector.broadcast %11 : vector<1x32xf32> to vector<8x32xf32>
    %147 = arith.addf %145, %146 : vector<8x32xf32>
    %148 = math.tanh %147 : vector<8x32xf32>
    %149 = arith.index_cast %c4_i32 : i32 to index
    %c0_48 = arith.constant 0 : index
    %c0_49 = arith.constant 0 : index
    %150 = vector.load %arg1[%149, %c0_48, %c0_49] : memref<8x8x1xf32, #tpu.memory_space<vmem>>, vector<1x8x1xf32>
    %151 = vector.shape_cast %150 : vector<1x8x1xf32> to vector<8x1xf32>
    %cst_50 = arith.constant 1.000000e+00 : f32
    %152 = vector.broadcast %cst_50 : f32 to vector<8x1xf32>
    %153 = arith.subf %151, %152 : vector<8x1xf32>
    %154 = vector.broadcast %153 : vector<8x1xf32> to vector<8x32xf32>
    %155 = arith.mulf %148, %154 : vector<8x32xf32>
    %156 = arith.addf %136, %155 : vector<8x32xf32>
    %157 = vector.extract_strided_slice %144 {offsets = [0, 0], sizes = [8, 96], strides = [1, 1]} : vector<8x128xf32> to vector<8x96xf32>
    %158 = arith.negf %157 : vector<8x96xf32>
    %159 = math.exp %158 : vector<8x96xf32>
    %cst_51 = arith.constant 1.000000e+00 : f32
    %160 = vector.broadcast %cst_51 : f32 to vector<8x96xf32>
    %161 = arith.addf %160, %159 : vector<8x96xf32>
    %162 = arith.divf %160, %161 : vector<8x96xf32>
    %163 = vector.extract_strided_slice %144 {offsets = [0, 96], sizes = [8, 32], strides = [1, 1]} : vector<8x128xf32> to vector<8x32xf32>
    %164 = math.tanh %163 : vector<8x32xf32>
    %165 = vector.extract_strided_slice %162 {offsets = [0, 0], sizes = [8, 32], strides = [1, 1]} : vector<8x96xf32> to vector<8x32xf32>
    %166 = vector.extract_strided_slice %162 {offsets = [0, 32], sizes = [8, 32], strides = [1, 1]} : vector<8x96xf32> to vector<8x32xf32>
    %167 = vector.extract_strided_slice %162 {offsets = [0, 64], sizes = [8, 32], strides = [1, 1]} : vector<8x96xf32> to vector<8x32xf32>
    %168 = arith.mulf %165, %156 : vector<8x32xf32>
    %169 = arith.mulf %166, %164 : vector<8x32xf32>
    %170 = arith.addf %168, %169 : vector<8x32xf32>
    %171 = math.tanh %170 : vector<8x32xf32>
    %172 = arith.mulf %167, %171 : vector<8x32xf32>
    %c5_i32 = arith.constant 5 : i32
    %c8_i32_52 = arith.constant 8 : i32
    %173 = arith.muli %c5_i32, %c8_i32_52 : i32
    %174 = tpu.assume_multiple %173, 8 : i32
    %175 = arith.index_cast %174 : i32 to index
    %c0_53 = arith.constant 0 : index
    %176 = vector.load %arg10[%175, %c0_53] : memref<64x128xf32, #tpu.memory_space<vmem>>, vector<8x128xf32>
    %cst_54 = arith.constant dense<0.000000e+00> : vector<8x128xf32>
    %177 = tpu.matmul %172, %9, %cst_54 {dimension_numbers = #tpu.dot_dimension_numbers<[1], [0], [0], [1], [0, 0, 1, 1], [], []>} : vector<8x32xf32>, vector<32x128xf32>, vector<8x128xf32> -> vector<8x128xf32>
    %178 = arith.addf %176, %177 : vector<8x128xf32>
    %cst_55 = arith.constant dense<0.000000e+00> : vector<8x32xf32>
    %179 = tpu.matmul %170, %10, %cst_55 {dimension_numbers = #tpu.dot_dimension_numbers<[1], [0], [0], [1], [0, 0, 1, 1], [], []>} : vector<8x32xf32>, vector<32x32xf32>, vector<8x32xf32> -> vector<8x32xf32>
    %180 = vector.broadcast %11 : vector<1x32xf32> to vector<8x32xf32>
    %181 = arith.addf %179, %180 : vector<8x32xf32>
    %182 = math.tanh %181 : vector<8x32xf32>
    %183 = arith.index_cast %c5_i32 : i32 to index
    %c0_56 = arith.constant 0 : index
    %c0_57 = arith.constant 0 : index
    %184 = vector.load %arg1[%183, %c0_56, %c0_57] : memref<8x8x1xf32, #tpu.memory_space<vmem>>, vector<1x8x1xf32>
    %185 = vector.shape_cast %184 : vector<1x8x1xf32> to vector<8x1xf32>
    %cst_58 = arith.constant 1.000000e+00 : f32
    %186 = vector.broadcast %cst_58 : f32 to vector<8x1xf32>
    %187 = arith.subf %185, %186 : vector<8x1xf32>
    %188 = vector.broadcast %187 : vector<8x1xf32> to vector<8x32xf32>
    %189 = arith.mulf %182, %188 : vector<8x32xf32>
    %190 = arith.addf %170, %189 : vector<8x32xf32>
    %191 = vector.extract_strided_slice %178 {offsets = [0, 0], sizes = [8, 96], strides = [1, 1]} : vector<8x128xf32> to vector<8x96xf32>
    %192 = arith.negf %191 : vector<8x96xf32>
    %193 = math.exp %192 : vector<8x96xf32>
    %cst_59 = arith.constant 1.000000e+00 : f32
    %194 = vector.broadcast %cst_59 : f32 to vector<8x96xf32>
    %195 = arith.addf %194, %193 : vector<8x96xf32>
    %196 = arith.divf %194, %195 : vector<8x96xf32>
    %197 = vector.extract_strided_slice %178 {offsets = [0, 96], sizes = [8, 32], strides = [1, 1]} : vector<8x128xf32> to vector<8x32xf32>
    %198 = math.tanh %197 : vector<8x32xf32>
    %199 = vector.extract_strided_slice %196 {offsets = [0, 0], sizes = [8, 32], strides = [1, 1]} : vector<8x96xf32> to vector<8x32xf32>
    %200 = vector.extract_strided_slice %196 {offsets = [0, 32], sizes = [8, 32], strides = [1, 1]} : vector<8x96xf32> to vector<8x32xf32>
    %201 = vector.extract_strided_slice %196 {offsets = [0, 64], sizes = [8, 32], strides = [1, 1]} : vector<8x96xf32> to vector<8x32xf32>
    %202 = arith.mulf %199, %190 : vector<8x32xf32>
    %203 = arith.mulf %200, %198 : vector<8x32xf32>
    %204 = arith.addf %202, %203 : vector<8x32xf32>
    %205 = math.tanh %204 : vector<8x32xf32>
    %206 = arith.mulf %201, %205 : vector<8x32xf32>
    %c6_i32 = arith.constant 6 : i32
    %c8_i32_60 = arith.constant 8 : i32
    %207 = arith.muli %c6_i32, %c8_i32_60 : i32
    %208 = tpu.assume_multiple %207, 8 : i32
    %209 = arith.index_cast %208 : i32 to index
    %c0_61 = arith.constant 0 : index
    %210 = vector.load %arg10[%209, %c0_61] : memref<64x128xf32, #tpu.memory_space<vmem>>, vector<8x128xf32>
    %cst_62 = arith.constant dense<0.000000e+00> : vector<8x128xf32>
    %211 = tpu.matmul %206, %9, %cst_62 {dimension_numbers = #tpu.dot_dimension_numbers<[1], [0], [0], [1], [0, 0, 1, 1], [], []>} : vector<8x32xf32>, vector<32x128xf32>, vector<8x128xf32> -> vector<8x128xf32>
    %212 = arith.addf %210, %211 : vector<8x128xf32>
    %cst_63 = arith.constant dense<0.000000e+00> : vector<8x32xf32>
    %213 = tpu.matmul %204, %10, %cst_63 {dimension_numbers = #tpu.dot_dimension_numbers<[1], [0], [0], [1], [0, 0, 1, 1], [], []>} : vector<8x32xf32>, vector<32x32xf32>, vector<8x32xf32> -> vector<8x32xf32>
    %214 = vector.broadcast %11 : vector<1x32xf32> to vector<8x32xf32>
    %215 = arith.addf %213, %214 : vector<8x32xf32>
    %216 = math.tanh %215 : vector<8x32xf32>
    %217 = arith.index_cast %c6_i32 : i32 to index
    %c0_64 = arith.constant 0 : index
    %c0_65 = arith.constant 0 : index
    %218 = vector.load %arg1[%217, %c0_64, %c0_65] : memref<8x8x1xf32, #tpu.memory_space<vmem>>, vector<1x8x1xf32>
    %219 = vector.shape_cast %218 : vector<1x8x1xf32> to vector<8x1xf32>
    %cst_66 = arith.constant 1.000000e+00 : f32
    %220 = vector.broadcast %cst_66 : f32 to vector<8x1xf32>
    %221 = arith.subf %219, %220 : vector<8x1xf32>
    %222 = vector.broadcast %221 : vector<8x1xf32> to vector<8x32xf32>
    %223 = arith.mulf %216, %222 : vector<8x32xf32>
    %224 = arith.addf %204, %223 : vector<8x32xf32>
    %225 = vector.extract_strided_slice %212 {offsets = [0, 0], sizes = [8, 96], strides = [1, 1]} : vector<8x128xf32> to vector<8x96xf32>
    %226 = arith.negf %225 : vector<8x96xf32>
    %227 = math.exp %226 : vector<8x96xf32>
    %cst_67 = arith.constant 1.000000e+00 : f32
    %228 = vector.broadcast %cst_67 : f32 to vector<8x96xf32>
    %229 = arith.addf %228, %227 : vector<8x96xf32>
    %230 = arith.divf %228, %229 : vector<8x96xf32>
    %231 = vector.extract_strided_slice %212 {offsets = [0, 96], sizes = [8, 32], strides = [1, 1]} : vector<8x128xf32> to vector<8x32xf32>
    %232 = math.tanh %231 : vector<8x32xf32>
    %233 = vector.extract_strided_slice %230 {offsets = [0, 0], sizes = [8, 32], strides = [1, 1]} : vector<8x96xf32> to vector<8x32xf32>
    %234 = vector.extract_strided_slice %230 {offsets = [0, 32], sizes = [8, 32], strides = [1, 1]} : vector<8x96xf32> to vector<8x32xf32>
    %235 = vector.extract_strided_slice %230 {offsets = [0, 64], sizes = [8, 32], strides = [1, 1]} : vector<8x96xf32> to vector<8x32xf32>
    %236 = arith.mulf %233, %224 : vector<8x32xf32>
    %237 = arith.mulf %234, %232 : vector<8x32xf32>
    %238 = arith.addf %236, %237 : vector<8x32xf32>
    %239 = math.tanh %238 : vector<8x32xf32>
    %240 = arith.mulf %235, %239 : vector<8x32xf32>
    %c7_i32 = arith.constant 7 : i32
    %c8_i32_68 = arith.constant 8 : i32
    %241 = arith.muli %c7_i32, %c8_i32_68 : i32
    %242 = tpu.assume_multiple %241, 8 : i32
    %243 = arith.index_cast %242 : i32 to index
    %c0_69 = arith.constant 0 : index
    %244 = vector.load %arg10[%243, %c0_69] : memref<64x128xf32, #tpu.memory_space<vmem>>, vector<8x128xf32>
    %cst_70 = arith.constant dense<0.000000e+00> : vector<8x128xf32>
    %245 = tpu.matmul %240, %9, %cst_70 {dimension_numbers = #tpu.dot_dimension_numbers<[1], [0], [0], [1], [0, 0, 1, 1], [], []>} : vector<8x32xf32>, vector<32x128xf32>, vector<8x128xf32> -> vector<8x128xf32>
    %246 = arith.addf %244, %245 : vector<8x128xf32>
    %cst_71 = arith.constant dense<0.000000e+00> : vector<8x32xf32>
    %247 = tpu.matmul %238, %10, %cst_71 {dimension_numbers = #tpu.dot_dimension_numbers<[1], [0], [0], [1], [0, 0, 1, 1], [], []>} : vector<8x32xf32>, vector<32x32xf32>, vector<8x32xf32> -> vector<8x32xf32>
    %248 = vector.broadcast %11 : vector<1x32xf32> to vector<8x32xf32>
    %249 = arith.addf %247, %248 : vector<8x32xf32>
    %250 = math.tanh %249 : vector<8x32xf32>
    %251 = arith.index_cast %c7_i32 : i32 to index
    %c0_72 = arith.constant 0 : index
    %c0_73 = arith.constant 0 : index
    %252 = vector.load %arg1[%251, %c0_72, %c0_73] : memref<8x8x1xf32, #tpu.memory_space<vmem>>, vector<1x8x1xf32>
    %253 = vector.shape_cast %252 : vector<1x8x1xf32> to vector<8x1xf32>
    %cst_74 = arith.constant 1.000000e+00 : f32
    %254 = vector.broadcast %cst_74 : f32 to vector<8x1xf32>
    %255 = arith.subf %253, %254 : vector<8x1xf32>
    %256 = vector.broadcast %255 : vector<8x1xf32> to vector<8x32xf32>
    %257 = arith.mulf %250, %256 : vector<8x32xf32>
    %258 = arith.addf %238, %257 : vector<8x32xf32>
    %259 = vector.extract_strided_slice %246 {offsets = [0, 0], sizes = [8, 96], strides = [1, 1]} : vector<8x128xf32> to vector<8x96xf32>
    %260 = arith.negf %259 : vector<8x96xf32>
    %261 = math.exp %260 : vector<8x96xf32>
    %cst_75 = arith.constant 1.000000e+00 : f32
    %262 = vector.broadcast %cst_75 : f32 to vector<8x96xf32>
    %263 = arith.addf %262, %261 : vector<8x96xf32>
    %264 = arith.divf %262, %263 : vector<8x96xf32>
    %265 = vector.extract_strided_slice %246 {offsets = [0, 96], sizes = [8, 32], strides = [1, 1]} : vector<8x128xf32> to vector<8x32xf32>
    %266 = math.tanh %265 : vector<8x32xf32>
    %267 = vector.extract_strided_slice %264 {offsets = [0, 0], sizes = [8, 32], strides = [1, 1]} : vector<8x96xf32> to vector<8x32xf32>
    %268 = vector.extract_strided_slice %264 {offsets = [0, 32], sizes = [8, 32], strides = [1, 1]} : vector<8x96xf32> to vector<8x32xf32>
    %269 = vector.extract_strided_slice %264 {offsets = [0, 64], sizes = [8, 32], strides = [1, 1]} : vector<8x96xf32> to vector<8x32xf32>
    %270 = arith.mulf %267, %258 : vector<8x32xf32>
    %271 = arith.mulf %268, %266 : vector<8x32xf32>
    %272 = arith.addf %270, %271 : vector<8x32xf32>
    %273 = math.tanh %272 : vector<8x32xf32>
    %274 = arith.mulf %269, %273 : vector<8x32xf32>
    %c7_i32_76 = arith.constant 7 : i32
    %cst_77 = arith.constant 0.000000e+00 : f32
    %275 = vector.broadcast %cst_77 : f32 to vector<8x32xf32>
    %276 = arith.maximumf %274, %275 : vector<8x32xf32>
    %c0_78 = arith.constant 0 : index
    %c0_79 = arith.constant 0 : index
    %277 = vector.load %arg7[%c0_78, %c0_79] : memref<32x2xf32, #tpu.memory_space<vmem>>, vector<32x2xf32>
    %cst_80 = arith.constant dense<0.000000e+00> : vector<8x2xf32>
    %278 = tpu.matmul %276, %277, %cst_80 {dimension_numbers = #tpu.dot_dimension_numbers<[1], [0], [0], [1], [0, 0, 1, 1], [], []>} : vector<8x32xf32>, vector<32x2xf32>, vector<8x2xf32> -> vector<8x2xf32>
    %c0_81 = arith.constant 0 : index
    %c0_82 = arith.constant 0 : index
    %279 = vector.load %arg8[%c0_81, %c0_82] : memref<1x2xf32, #tpu.memory_space<vmem>>, vector<1x2xf32>
    %280 = vector.broadcast %279 : vector<1x2xf32> to vector<8x2xf32>
    %281 = arith.addf %278, %280 : vector<8x2xf32>
    %c0_83 = arith.constant 0 : index
    %c0_84 = arith.constant 0 : index
    %282 = vector.load %arg9[%c0_83, %c0_84] : memref<8x2xf32, #tpu.memory_space<vmem>>, vector<8x2xf32>
    tpu.vector_store %arg9[%c0_83, %c0_84], %281 {strides = array<i32>} : memref<8x2xf32, #tpu.memory_space<vmem>>, vector<8x2xf32>,
    return
  }
}

</mosaic_0001>

<llo_original>
// kernel: tpu_custom_call.1
$region0: #{tpu_custom_call.1}
  #allocation0 [shape = 'u32[]', space=smem, size = 0x4, offset = 0x4, fixed_abs, tag = 'smem constant byte address 0x4 - core index']
  #allocation1 [shape = 'u32[72,128]{1,0:T(1,128)}', space=vmem, size = 0x9000, scoped, tag = 'internal scratch']
  #allocation2 [shape = 'f32[64,128]{1,0:T(8,128)}', space=vmem, size = 0x8000, scoped, tag = 'scratch operand']
  %s0 = inlined_call_operand.hbm [shape: f32[64,512], index: 0, kind: input, shape index: {}]
  %s1 = inlined_call_operand.vmem [shape: f32[8,8,1], index: 1, kind: input, shape index: {}]
  %s2 = inlined_call_operand.hbm [shape: f32[512,128], index: 2, kind: input, shape index: {}]
  %s3 = inlined_call_operand.vmem [shape: f32[1,128], index: 3, kind: input, shape index: {}]
  %s4 = inlined_call_operand.vmem [shape: f32[32,128], index: 4, kind: input, shape index: {}]
  %s5 = inlined_call_operand.vmem [shape: f32[32,32], index: 5, kind: input, shape index: {}]
  %s6 = inlined_call_operand.vmem [shape: f32[1,32], index: 6, kind: input, shape index: {}]
  %s7 = inlined_call_operand.vmem [shape: f32[32,2], index: 7, kind: input, shape index: {}]
  %s8 = inlined_call_operand.vmem [shape: f32[1,2], index: 8, kind: input, shape index: {}]
  %s9 = inlined_call_operand.vmem [shape: f32[8,2], index: 9, kind: output, shape index: {}]
  %s10 = sld [smem:[#allocation0]]
  $region54: #{tpu_custom_call.1} parent=0
    _
  %s12 = ssub.s32 1, %s10
  %s13 = scalar_select 0, %s12, %s10
  $region1: #{tpu_custom_call.1} parent=0
    #allocation3 [shape = 'u8[131072]{0}', space=vmem, size = 0x20000, scoped, tag = 'input window, operand 0, single buffered']
    #allocation4 [shape = 's32[1]{0}', space=sflag, size = 0x4, scoped, tag = 'scoped memory for tpu_custom_call.1']
    #allocation5 [shape = 'u8[262144]{0}', space=vmem, size = 0x40000, scoped, tag = 'input window, operand 2, single buffered']
    #allocation6 [shape = 's32[1]{0}', space=sflag, size = 0x4, scoped, tag = 'scoped memory for tpu_custom_call.1']
    %14 = vsyncpa [#allocation4], 0
    %15 = vsyncpa [#allocation6], 0
    // Predicated region
    $region2: #{tpu_custom_call.1} parent=1 // pred_check
      _
    $region3: #{tpu_custom_call.1} parent=1 // pred_check_branch
      %17 = sbr.rel (0) target = $region5
    $region4: #{tpu_custom_call.1} parent=1 // pred_region
      %19 = vsyncadd [#allocation4], 0
      %s20 = sshll.u32 %s0, 4
      %s21 = int_to_ptr.hbm [resolvable:$true] %s20
      %s22 = sshll.u32 [#allocation3], 4
      %s23 = int_to_ptr.vmem [resolvable:$true] %s22
      %28 = dma.hbm_to_vmem [thread:$0]  %s21, 4096, %s23, [#allocation4], 512, 512, 32
    $region5: #{tpu_custom_call.1} parent=1 // pred_fallthru
      _
    // Predicated region
    $region6: #{tpu_custom_call.1} parent=1 // pred_check
      _
    $region7: #{tpu_custom_call.1} parent=1 // pred_check_branch
      %30 = sbr.rel (0) target = $region9
    $region8: #{tpu_custom_call.1} parent=1 // pred_region
      _
    $region9: #{tpu_custom_call.1} parent=1 // pred_fallthru
      _
    // Predicated region
    $region10: #{tpu_custom_call.1} parent=1 // pred_check
      _
    $region11: #{tpu_custom_call.1} parent=1 // pred_check_branch
      %32 = sbr.rel (0) target = $region13
    $region12: #{tpu_custom_call.1} parent=1 // pred_region
      %34 = vsyncadd [#allocation6], 0
      %s35 = sshll.u32 %s2, 4
      %s36 = int_to_ptr.hbm [resolvable:$true] %s35
      %s37 = sshll.u32 [#allocation5], 4
      %s38 = int_to_ptr.vmem [resolvable:$true] %s37
      %43 = dma.hbm_to_vmem [thread:$0]  %s36, 8192, %s38, [#allocation6], 128, 128, 8
    $region13: #{tpu_custom_call.1} parent=1 // pred_fallthru
      _
    // Predicated region
    $region14: #{tpu_custom_call.1} parent=1 // pred_check
      _
    $region15: #{tpu_custom_call.1} parent=1 // pred_check_branch
      %45 = sbr.rel (0) target = $region17
    $region16: #{tpu_custom_call.1} parent=1 // pred_region
      _
    $region17: #{tpu_custom_call.1} parent=1 // pred_fallthru
      _
    // Predicated region
    $region18: #{tpu_custom_call.1} parent=1 // pred_check
      _
    $region19: #{tpu_custom_call.1} parent=1 // pred_check_branch
      %47 = sbr.rel (0) target = $region21
    $region20: #{tpu_custom_call.1} parent=1 // pred_region
      _
    $region21: #{tpu_custom_call.1} parent=1 // pred_fallthru
      _
    // Predicated region
    $region22: #{tpu_custom_call.1} parent=1 // pred_check
      _
    $region23: #{tpu_custom_call.1} parent=1 // pred_check_branch
      %49 = sbr.rel (0) target = $region25
    $region24: #{tpu_custom_call.1} parent=1 // pred_region
      _
    $region25: #{tpu_custom_call.1} parent=1 // pred_fallthru
      _
    // Predicated region
    $region26: #{tpu_custom_call.1} parent=1 // pred_check
      _
    $region27: #{tpu_custom_call.1} parent=1 // pred_check_branch
      %51 = sbr.rel (0) target = $region29
    $region28: #{tpu_custom_call.1} parent=1 // pred_region
      _
    $region29: #{tpu_custom_call.1} parent=1 // pred_fallthru
      _
    // Predicated region
    $region30: #{tpu_custom_call.1} parent=1 // pred_check
      _
    $region31: #{tpu_custom_call.1} parent=1 // pred_check_branch
      %53 = sbr.rel (0) target = $region33
    $region32: #{tpu_custom_call.1} parent=1 // pred_region
      _
    $region33: #{tpu_custom_call.1} parent=1 // pred_fallthru
      _
    // Predicated region
    $region34: #{tpu_custom_call.1} parent=1 // pred_check
      _
    $region35: #{tpu_custom_call.1} parent=1 // pred_check_branch
      %55 = sbr.rel (0) target = $region37
    $region36: #{tpu_custom_call.1} parent=1 // pred_region
      _
    $region37: #{tpu_custom_call.1} parent=1 // pred_fallthru
      _
    // Predicated region
    $region38: #{tpu_custom_call.1} parent=1 // pred_check
      _
    $region39: #{tpu_custom_call.1} parent=1 // pred_check_branch
      %57 = sbr.rel (0) target = $region41
    $region40: #{tpu_custom_call.1} parent=1 // pred_region
      %59 = dma.done [#allocation4], 4096
    $region41: #{tpu_custom_call.1} parent=1 // pred_fallthru
      _
    // Predicated region
    $region42: #{tpu_custom_call.1} parent=1 // pred_check
      _
    $region43: #{tpu_custom_call.1} parent=1 // pred_check_branch
      %61 = sbr.rel (0) target = $region45
    $region44: #{tpu_custom_call.1} parent=1 // pred_region
      %63 = dma.done [#allocation6], 8192
    $region45: #{tpu_custom_call.1} parent=1 // pred_fallthru
      _
    %v64 = vld [vmem:[#allocation3] sm:$0xff]
    %v65 = vld [vmem:[#allocation3 + $0x8] sm:$0xff]
    %v66 = vld [vmem:[#allocation3 + $0x10] sm:$0xff]
    %v67 = vld [vmem:[#allocation3 + $0x18] sm:$0xff]
    %v68 = vld [vmem:[#allocation3 + $0x20] sm:$0xff]
    %v69 = vld [vmem:[#allocation3 + $0x28] sm:$0xff]
    %v70 = vld [vmem:[#allocation3 + $0x30] sm:$0xff]
    %v71 = vld [vmem:[#allocation3 + $0x38] sm:$0xff]
    %v72 = vld [vmem:[#allocation3 + $0x40] sm:$0xff]
    %v73 = vld [vmem:[#allocation3 + $0x48] sm:$0xff]
    %v74 = vld [vmem:[#allocation3 + $0x50] sm:$0xff]
    %v75 = vld [vmem:[#allocation3 + $0x58] sm:$0xff]
    %v76 = vld [vmem:[#allocation3 + $0x60] sm:$0xff]
    %v77 = vld [vmem:[#allocation3 + $0x68] sm:$0xff]
    %v78 = vld [vmem:[#allocation3 + $0x70] sm:$0xff]
    %v79 = vld [vmem:[#allocation3 + $0x78] sm:$0xff]
    %v80 = vld [vmem:[#allocation3 + $0x80] sm:$0xff]
    %v81 = vld [vmem:[#allocation3 + $0x88] sm:$0xff]
    %v82 = vld [vmem:[#allocation3 + $0x90] sm:$0xff]
    %v83 = vld [vmem:[#allocation3 + $0x98] sm:$0xff]
    %v84 = vld [vmem:[#allocation3 + $0xa0] sm:$0xff]
    %v85 = vld [vmem:[#allocation3 + $0xa8] sm:$0xff]
    %v86 = vld [vmem:[#allocation3 + $0xb0] sm:$0xff]
    %v87 = vld [vmem:[#allocation3 + $0xb8] sm:$0xff]
    %v88 = vld [vmem:[#allocation3 + $0xc0] sm:$0xff]
    %v89 = vld [vmem:[#allocation3 + $0xc8] sm:$0xff]
    %v90 = vld [vmem:[#allocation3 + $0xd0] sm:$0xff]
    %v91 = vld [vmem:[#allocation3 + $0xd8] sm:$0xff]
    %v92 = vld [vmem:[#allocation3 + $0xe0] sm:$0xff]
    %v93 = vld [vmem:[#allocation3 + $0xe8] sm:$0xff]
    %v94 = vld [vmem:[#allocation3 + $0xf0] sm:$0xff]
    %v95 = vld [vmem:[#allocation3 + $0xf8] sm:$0xff]
    %v96 = vmax.f32 %v64, 0.0
    %v97 = vmax.f32 %v65, 0.0
    %v98 = vmax.f32 %v66, 0.0
    %v99 = vmax.f32 %v67, 0.0
    %v100 = vmax.f32 %v68, 0.0
    %v101 = vmax.f32 %v69, 0.0
    %v102 = vmax.f32 %v70, 0.0
    %v103 = vmax.f32 %v71, 0.0
    %v104 = vmax.f32 %v72, 0.0
    %v105 = vmax.f32 %v73, 0.0
    %v106 = vmax.f32 %v74, 0.0
    %v107 = vmax.f32 %v75, 0.0
    %v108 = vmax.f32 %v76, 0.0
    %v109 = vmax.f32 %v77, 0.0
    %v110 = vmax.f32 %v78, 0.0
    %v111 = vmax.f32 %v79, 0.0
    %v112 = vmax.f32 %v80, 0.0
    %v113 = vmax.f32 %v81, 0.0
    %v114 = vmax.f32 %v82, 0.0
    %v115 = vmax.f32 %v83, 0.0
    %v116 = vmax.f32 %v84, 0.0
    %v117 = vmax.f32 %v85, 0.0
    %v118 = vmax.f32 %v86, 0.0
    %v119 = vmax.f32 %v87, 0.0
    %v120 = vmax.f32 %v88, 0.0
    %v121 = vmax.f32 %v89, 0.0
    %v122 = vmax.f32 %v90, 0.0
    %v123 = vmax.f32 %v91, 0.0
    %v124 = vmax.f32 %v92, 0.0
    %v125 = vmax.f32 %v93, 0.0
    %v126 = vmax.f32 %v94, 0.0
    %v127 = vmax.f32 %v95, 0.0
    %v128 = vld [vmem:[#allocation5] sm:$0xff]
    %v129 = vld [vmem:[#allocation5 + $0x8] sm:$0xff]
    %v130 = vld [vmem:[#allocation5 + $0x10] sm:$0xff]
    %v131 = vld [vmem:[#allocation5 + $0x18] sm:$0xff]
    %v132 = vld [vmem:[#allocation5 + $0x20] sm:$0xff]
    %v133 = vld [vmem:[#allocation5 + $0x28] sm:$0xff]
    %v134 = vld [vmem:[#allocation5 + $0x30] sm:$0xff]
    %v135 = vld [vmem:[#allocation5 + $0x38] sm:$0xff]
    %v136 = vld [vmem:[#allocation5 + $0x40] sm:$0xff]
    %v137 = vld [vmem:[#allocation5 + $0x48] sm:$0xff]
    %v138 = vld [vmem:[#allocation5 + $0x50] sm:$0xff]
    %v139 = vld [vmem:[#allocation5 + $0x58] sm:$0xff]
    %v140 = vld [vmem:[#allocation5 + $0x60] sm:$0xff]
    %v141 = vld [vmem:[#allocation5 + $0x68] sm:$0xff]
    %v142 = vld [vmem:[#allocation5 + $0x70] sm:$0xff]
    %v143 = vld [vmem:[#allocation5 + $0x78] sm:$0xff]
    %v144 = vld [vmem:[#allocation5 + $0x80] sm:$0xff]
    %v145 = vld [vmem:[#allocation5 + $0x88] sm:$0xff]
    %v146 = vld [vmem:[#allocation5 + $0x90] sm:$0xff]
    %v147 = vld [vmem:[#allocation5 + $0x98] sm:$0xff]
    %v148 = vld [vmem:[#allocation5 + $0xa0] sm:$0xff]
    %v149 = vld [vmem:[#allocation5 + $0xa8] sm:$0xff]
    %v150 = vld [vmem:[#allocation5 + $0xb0] sm:$0xff]
    %v151 = vld [vmem:[#allocation5 + $0xb8] sm:$0xff]
    %v152 = vld [vmem:[#allocation5 + $0xc0] sm:$0xff]
    %v153 = vld [vmem:[#allocation5 + $0xc8] sm:$0xff]
    %v154 = vld [vmem:[#allocation5 + $0xd0] sm:$0xff]
    %v155 = vld [vmem:[#allocation5 + $0xd8] sm:$0xff]
    %v156 = vld [vmem:[#allocation5 + $0xe0] sm:$0xff]
    %v157 = vld [vmem:[#allocation5 + $0xe8] sm:$0xff]
    %v158 = vld [vmem:[#allocation5 + $0xf0] sm:$0xff]
    %v159 = vld [vmem:[#allocation5 + $0xf8] sm:$0xff]
    %v160 = vld [vmem:[#allocation5 + $0x100] sm:$0xff]
    %v161 = vld [vmem:[#allocation5 + $0x108] sm:$0xff]
    %v162 = vld [vmem:[#allocation5 + $0x110] sm:$0xff]
    %v163 = vld [vmem:[#allocation5 + $0x118] sm:$0xff]
    %v164 = vld [vmem:[#allocation5 + $0x120] sm:$0xff]
    %v165 = vld [vmem:[#allocation5 + $0x128] sm:$0xff]
    %v166 = vld [vmem:[#allocation5 + $0x130] sm:$0xff]
    %v167 = vld [vmem:[#allocation5 + $0x138] sm:$0xff]
    %v168 = vld [vmem:[#allocation5 + $0x140] sm:$0xff]
    %v169 = vld [vmem:[#allocation5 + $0x148] sm:$0xff]
    %v170 = vld [vmem:[#allocation5 + $0x150] sm:$0xff]
    %v171 = vld [vmem:[#allocation5 + $0x158] sm:$0xff]
    %v172 = vld [vmem:[#allocation5 + $0x160] sm:$0xff]
    %v173 = vld [vmem:[#allocation5 + $0x168] sm:$0xff]
    %v174 = vld [vmem:[#allocation5 + $0x170] sm:$0xff]
    %v175 = vld [vmem:[#allocation5 + $0x178] sm:$0xff]
    %v176 = vld [vmem:[#allocation5 + $0x180] sm:$0xff]
    %v177 = vld [vmem:[#allocation5 + $0x188] sm:$0xff]
    %v178 = vld [vmem:[#allocation5 + $0x190] sm:$0xff]
    %v179 = vld [vmem:[#allocation5 + $0x198] sm:$0xff]
    %v180 = vld [vmem:[#allocation5 + $0x1a0] sm:$0xff]
    %v181 = vld [vmem:[#allocation5 + $0x1a8] sm:$0xff]
    %v182 = vld [vmem:[#allocation5 + $0x1b0] sm:$0xff]
    %v183 = vld [vmem:[#allocation5 + $0x1b8] sm:$0xff]
    %v184 = vld [vmem:[#allocation5 + $0x1c0] sm:$0xff]
    %v185 = vld [vmem:[#allocation5 + $0x1c8] sm:$0xff]
    %v186 = vld [vmem:[#allocation5 + $0x1d0] sm:$0xff]
    %v187 = vld [vmem:[#allocation5 + $0x1d8] sm:$0xff]
    %v188 = vld [vmem:[#allocation5 + $0x1e0] sm:$0xff]
    %v189 = vld [vmem:[#allocation5 + $0x1e8] sm:$0xff]
    %v190 = vld [vmem:[#allocation5 + $0x1f0] sm:$0xff]
    %v191 = vld [vmem:[#allocation5 + $0x1f8] sm:$0xff]
    %v192 = vld [vmem:[%s3] sm:$0x1]
    %v194 = vperm.slane %v192, 0
    %196 = vmatpush.msra.mxu0 %v143
    %197 = vmatpush.msra.mxu0 %v142
    %198 = vmatpush.msra.mxu0 %v141
    %199 = vmatpush.msra.mxu0 %v140
    %200 = vmatpush.msra.mxu0 %v139
    %201 = vmatpush.msra.mxu0 %v138
    %202 = vmatpush.msra.mxu0 %v137
    %203 = vmatpush.msra.mxu0 %v136
    %204 = vmatpush.msra.mxu0 %v135
    %205 = vmatpush.msra.mxu0 %v134
    %206 = vmatpush.msra.mxu0 %v133
    %207 = vmatpush.msra.mxu0 %v132
    %208 = vmatpush.msra.mxu0 %v131
    %209 = vmatpush.msra.mxu0 %v130
    %210 = vmatpush.msra.mxu0 %v129
    %211 = vmatpush.msra.mxu0 %v128
    %212 = vmatmul.f32.gmra.mxu0 %v96
    %v213 = vpop.f32.mrf.mxu0
    %v214 = vadd.f32 %v194, %v213
    %215 = vmatmul.f32.gmra.mxu0 %v100
    %v216 = vpop.f32.mrf.mxu0
    %v217 = vadd.f32 %v194, %v216
    %218 = vmatmul.f32.gmra.mxu0 %v104
    %v219 = vpop.f32.mrf.mxu0
    %v220 = vadd.f32 %v194, %v219
    %221 = vmatmul.f32.gmra.mxu0 %v108
    %v222 = vpop.f32.mrf.mxu0
    %v223 = vadd.f32 %v194, %v222
    %224 = vmatmul.f32.gmra.mxu0 %v112
    %v225 = vpop.f32.mrf.mxu0
    %v226 = vadd.f32 %v194, %v225
    %227 = vmatmul.f32.gmra.mxu0 %v116
    %v228 = vpop.f32.mrf.mxu0
    %v229 = vadd.f32 %v194, %v228
    %230 = vmatmul.f32.gmra.mxu0 %v120
    %v231 = vpop.f32.mrf.mxu0
    %v232 = vadd.f32 %v194, %v231
    %233 = vmatmul.f32.gmra.mxu0 %v124
    %v234 = vpop.f32.mrf.mxu0
    %v235 = vadd.f32 %v194, %v234
    %236 = vdwg.mxu0
    %237 = vmatpush.msra.mxu0 %v159
    %238 = vmatpush.msra.mxu0 %v158
    %239 = vmatpush.msra.mxu0 %v157
    %240 = vmatpush.msra.mxu0 %v156
    %241 = vmatpush.msra.mxu0 %v155
    %242 = vmatpush.msra.mxu0 %v154
    %243 = vmatpush.msra.mxu0 %v153
    %244 = vmatpush.msra.mxu0 %v152
    %245 = vmatpush.msra.mxu0 %v151
    %246 = vmatpush.msra.mxu0 %v150
    %247 = vmatpush.msra.mxu0 %v149
    %248 = vmatpush.msra.mxu0 %v148
    %249 = vmatpush.msra.mxu0 %v147
    %250 = vmatpush.msra.mxu0 %v146
    %251 = vmatpush.msra.mxu0 %v145
    %252 = vmatpush.msra.mxu0 %v144
    %253 = vmatmul.f32.gmra.mxu0 %v97
    %v254 = vpop.f32.mrf.mxu0
    %v255 = vadd.f32 %v214, %v254
    %256 = vmatmul.f32.gmra.mxu0 %v101
    %v257 = vpop.f32.mrf.mxu0
    %v258 = vadd.f32 %v217, %v257
    %259 = vmatmul.f32.gmra.mxu0 %v105
    %v260 = vpop.f32.mrf.mxu0
    %v261 = vadd.f32 %v220, %v260
    %262 = vmatmul.f32.gmra.mxu0 %v109
    %v263 = vpop.f32.mrf.mxu0
    %v264 = vadd.f32 %v223, %v263
    %265 = vmatmul.f32.gmra.mxu0 %v113
    %v266 = vpop.f32.mrf.mxu0
    %v267 = vadd.f32 %v226, %v266
    %268 = vmatmul.f32.gmra.mxu0 %v117
    %v269 = vpop.f32.mrf.mxu0
    %v270 = vadd.f32 %v229, %v269
    %271 = vmatmul.f32.gmra.mxu0 %v121
    %v272 = vpop.f32.mrf.mxu0
    %v273 = vadd.f32 %v232, %v272
    %274 = vmatmul.f32.gmra.mxu0 %v125
    %v275 = vpop.f32.mrf.mxu0
    %v276 = vadd.f32 %v235, %v275
    %277 = vdwg.mxu0
    %278 = vmatpush.msra.mxu0 %v175
    %279 = vmatpush.msra.mxu0 %v174
    %280 = vmatpush.msra.mxu0 %v173
    %281 = vmatpush.msra.mxu0 %v172
    %282 = vmatpush.msra.mxu0 %v171
    %283 = vmatpush.msra.mxu0 %v170
    %284 = vmatpush.msra.mxu0 %v169
    %285 = vmatpush.msra.mxu0 %v168
    %286 = vmatpush.msra.mxu0 %v167
    %287 = vmatpush.msra.mxu0 %v166
    %288 = vmatpush.msra.mxu0 %v165
    %289 = vmatpush.msra.mxu0 %v164
    %290 = vmatpush.msra.mxu0 %v163
    %291 = vmatpush.msra.mxu0 %v162
    %292 = vmatpush.msra.mxu0 %v161
    %293 = vmatpush.msra.mxu0 %v160
    %294 = vmatmul.f32.gmra.mxu0 %v98
    %v295 = vpop.f32.mrf.mxu0
    %v296 = vadd.f32 %v255, %v295
    %297 = vmatmul.f32.gmra.mxu0 %v102
    %v298 = vpop.f32.mrf.mxu0
    %v299 = vadd.f32 %v258, %v298
    %300 = vmatmul.f32.gmra.mxu0 %v106
    %v301 = vpop.f32.mrf.mxu0
    %v302 = vadd.f32 %v261, %v301
    %303 = vmatmul.f32.gmra.mxu0 %v110
    %v304 = vpop.f32.mrf.mxu0
    %v305 = vadd.f32 %v264, %v304
    %306 = vmatmul.f32.gmra.mxu0 %v114
    %v307 = vpop.f32.mrf.mxu0
    %v308 = vadd.f32 %v267, %v307
    %309 = vmatmul.f32.gmra.mxu0 %v118
    %v310 = vpop.f32.mrf.mxu0
    %v311 = vadd.f32 %v270, %v310
    %312 = vmatmul.f32.gmra.mxu0 %v122
    %v313 = vpop.f32.mrf.mxu0
    %v314 = vadd.f32 %v273, %v313
    %315 = vmatmul.f32.gmra.mxu0 %v126
    %v316 = vpop.f32.mrf.mxu0
    %v317 = vadd.f32 %v276, %v316
    %318 = vdwg.mxu0
    %319 = vmatpush.msra.mxu0 %v191
    %320 = vmatpush.msra.mxu0 %v190
    %321 = vmatpush.msra.mxu0 %v189
    %322 = vmatpush.msra.mxu0 %v188
    %323 = vmatpush.msra.mxu0 %v187
    %324 = vmatpush.msra.mxu0 %v186
    %325 = vmatpush.msra.mxu0 %v185
    %326 = vmatpush.msra.mxu0 %v184
    %327 = vmatpush.msra.mxu0 %v183
    %328 = vmatpush.msra.mxu0 %v182
    %329 = vmatpush.msra.mxu0 %v181
    %330 = vmatpush.msra.mxu0 %v180
    %331 = vmatpush.msra.mxu0 %v179
    %332 = vmatpush.msra.mxu0 %v178
    %333 = vmatpush.msra.mxu0 %v177
    %334 = vmatpush.msra.mxu0 %v176
    %335 = vmatmul.f32.gmra.mxu0 %v99
    %v336 = vpop.f32.mrf.mxu0
    %v337 = vadd.f32 %v296, %v336
    %338 = vmatmul.f32.gmra.mxu0 %v103
    %v339 = vpop.f32.mrf.mxu0
    %v340 = vadd.f32 %v299, %v339
    %341 = vmatmul.f32.gmra.mxu0 %v107
    %v342 = vpop.f32.mrf.mxu0
    %v343 = vadd.f32 %v302, %v342
    %344 = vmatmul.f32.gmra.mxu0 %v111
    %v345 = vpop.f32.mrf.mxu0
    %v346 = vadd.f32 %v305, %v345
    %347 = vmatmul.f32.gmra.mxu0 %v115
    %v348 = vpop.f32.mrf.mxu0
    %v349 = vadd.f32 %v308, %v348
    %350 = vmatmul.f32.gmra.mxu0 %v119
    %v351 = vpop.f32.mrf.mxu0
    %v352 = vadd.f32 %v311, %v351
    %353 = vmatmul.f32.gmra.mxu0 %v123
    %v354 = vpop.f32.mrf.mxu0
    %v355 = vadd.f32 %v314, %v354
    %356 = vmatmul.f32.gmra.mxu0 %v127
    %v357 = vpop.f32.mrf.mxu0
    %v358 = vadd.f32 %v317, %v357
    %359 = vdwg.mxu0
    %360 = vst [vmem:[#allocation2] sm:$0xff] %v337
    %361 = vst [vmem:[#allocation2 + $0x8] sm:$0xff] %v340
    %362 = vst [vmem:[#allocation2 + $0x10] sm:$0xff] %v343
    %363 = vst [vmem:[#allocation2 + $0x18] sm:$0xff] %v346
    %364 = vst [vmem:[#allocation2 + $0x20] sm:$0xff] %v349
    %365 = vst [vmem:[#allocation2 + $0x28] sm:$0xff] %v352
    %366 = vst [vmem:[#allocation2 + $0x30] sm:$0xff] %v355
    %367 = vst [vmem:[#allocation2 + $0x38] sm:$0xff] %v358
    %v368 = vld [vmem:[%s4] sm:$0xff]
    %v369 = vld [vmem:[%s4 + $0x8] sm:$0xff]
    %v370 = vld [vmem:[%s4 + $0x10] sm:$0xff]
    %v371 = vld [vmem:[%s4 + $0x18] sm:$0xff]
    %v372 = vld [vmem:[%s5] sm:$0xff]
    %v373 = vld [vmem:[%s5 + $0x8] sm:$0xff]
    %v374 = vld [vmem:[%s5 + $0x10] sm:$0xff]
    %v375 = vld [vmem:[%s5 + $0x18] sm:$0xff]
    %v376 = vld [vmem:[%s6] sm:$0x1]
    %v377 = vld [vmem:[#allocation2] sm:$0xff]
    %v378 = vxor.u32 %v377, 2147483648
    %v379 = vmul.f32 %v378, 1.442695
    %v380 = vpow.pop %v379
    %v381 = vadd.f32 %v380, 1.0
    %v382 = vrcp.pop %v381
    %v383 = vmul.f32 %v381, %v382
    %v384 = vsub.f32 1.0, %v383
    %v385 = vmul.f32 %v382, %v384
    %v386 = vadd.f32 %v382, %v385
    %vm387 = vweird.f32 %v381
    %vm388 = vweird.f32 %v382
    %vm389 = vmor %vm387, %vm388
    %v390 = vsel %vm389, %v382, %v386
    %v391 = vand.u32 2147483647, %v381
    %vm392 = vcmp.eq.f32.partialorder %v391, 8.507059e+37
    %v393 = vand.u32 %v381, 2147483648
    %v394 = vor.u32 1.1754944e-38, %v393
    %v395 = vsel %vm392, %v394, %v390
    %v396 = vmul.f32 1.0, %v395
    %v397 = vtanh.pop %v377
    %v398 = vtanh.pop %v376
    %v399 = vld [vmem:[%s1] sm:$0xff]
    %v400 = vsub.f32 %v399, 1.0
    %v402 = vperm.slane %v398, 0
    %405 = vset.pattern.permute.xlu0 0
    %406 = vperm.xlu0 %405, %v400
    %v407 = vpop.permute.xlu0 %406
    %v409 = vmul.f32 %v402, %v407
    %v410 = vmul.f32 %v396, %v409
    %412 = vrot.lane.b32.xlu0 %v397, 64
    %v413 = vpop.permute.xlu0 %412
    %v415 = vmul.f32 %v396, %v413
    %417 = vrot.lane.b32.xlu0 %v415, 96
    %v418 = vpop.permute.xlu0 %417
    %v420 = vadd.f32 %v410, %v418
    %v421 = vtanh.pop %v420
    %423 = vrot.lane.b32.xlu0 %v421, 64
    %v424 = vpop.permute.xlu0 %423
    %v426 = vmul.f32 %v396, %v424
    %s427 = scalar_lea.vmem [#allocation2], 8
    %v428 = vld [vmem:[%s427] sm:$0xff]
    %430 = vrot.lane.b32.xlu0 %v426, 64
    %v431 = vpop.permute.xlu0 %430
    %vm432 = vcmask 261120
    %v433 = vsel %vm432, %v431, 0
    %435 = vmatpush.msra.mxu0 0.0
    %436 = vmatpush.msra.mxu0 0.0
    %437 = vmatpush.msra.mxu0 0.0
    %438 = vmatpush.msra.mxu0 0.0
    %439 = vmatpush.msra.mxu0 0.0
    %440 = vmatpush.msra.mxu0 0.0
    %441 = vmatpush.msra.mxu0 0.0
    %442 = vmatpush.msra.mxu0 0.0
    %443 = vmatpush.msra.mxu0 0.0
    %444 = vmatpush.msra.mxu0 0.0
    %445 = vmatpush.msra.mxu0 0.0
    %446 = vmatpush.msra.mxu0 0.0
    %447 = vmatpush.msra.mxu0 %v371
    %448 = vmatpush.msra.mxu0 %v370
    %449 = vmatpush.msra.mxu0 %v369
    %450 = vmatpush.msra.mxu0 %v368
    %451 = vmatmul.f32.gmra.mxu0 %v433
    %v452 = vpop.f32.mrf.mxu0
    %v453 = vadd.f32 0.0, %v452
    %454 = vdwg.mxu0
    %v455 = vadd.f32 %v428, %v453
    %v457 = vperm.slane %v376, 0
    %v460 = vsel %vm432, %v420, 0
    %462 = vmatpush.msra.mxu0 0.0
    %463 = vmatpush.msra.mxu0 0.0
    %464 = vmatpush.msra.mxu0 0.0
    %465 = vmatpush.msra.mxu0 0.0
    %466 = vmatpush.msra.mxu0 0.0
    %467 = vmatpush.msra.mxu0 0.0
    %468 = vmatpush.msra.mxu0 0.0
    %469 = vmatpush.msra.mxu0 0.0
    %470 = vmatpush.msra.mxu0 0.0
    %471 = vmatpush.msra.mxu0 0.0
    %472 = vmatpush.msra.mxu0 0.0
    %473 = vmatpush.msra.mxu0 0.0
    %474 = vmatpush.msra.mxu0 %v375
    %475 = vmatpush.msra.mxu0 %v374
    %476 = vmatpush.msra.mxu0 %v373
    %477 = vmatpush.msra.mxu0 %v372
    %478 = vmatmul.f32.gmra.mxu0 %v460
    %v479 = vpop.f32.mrf.mxu0
    %v480 = vadd.f32 %v457, %v479
    %481 = vdwg.mxu0
    %v482 = vtanh.pop %v480
    %s483 = scalar_lea.vmem %s1, 8
    %v484 = vld [vmem:[%s483] sm:$0xff]
    %v485 = vsub.f32 %v484, 1.0
    %487 = vset.pattern.permute.xlu0 0
    %488 = vperm.xlu0 %487, %v485
    %v489 = vpop.permute.xlu0 %488
    %v491 = vmul.f32 %v482, %v489
    %v492 = vadd.f32 %v420, %v491
    %v493 = vxor.u32 %v455, 2147483648
    %v494 = vmul.f32 %v493, 1.442695
    %v495 = vpow.pop %v494
    %v496 = vadd.f32 %v495, 1.0
    %v497 = vrcp.pop %v496
    %v498 = vmul.f32 %v496, %v497
    %v499 = vsub.f32 1.0, %v498
    %v500 = vmul.f32 %v497, %v499
    %v501 = vadd.f32 %v497, %v500
    %vm502 = vweird.f32 %v496
    %vm503 = vweird.f32 %v497
    %vm504 = vmor %vm502, %vm503
    %v505 = vsel %vm504, %v497, %v501
    %v506 = vand.u32 2147483647, %v496
    %vm507 = vcmp.eq.f32.partialorder %v506, 8.507059e+37
    %v508 = vand.u32 %v496, 2147483648
    %v509 = vor.u32 1.1754944e-38, %v508
    %v510 = vsel %vm507, %v509, %v505
    %v511 = vmul.f32 1.0, %v510
    %v512 = vtanh.pop %v455
    %v513 = vmul.f32 %v511, %v492
    %515 = vrot.lane.b32.xlu0 %v512, 64
    %v516 = vpop.permute.xlu0 %515
    %v518 = vmul.f32 %v511, %v516
    %520 = vrot.lane.b32.xlu0 %v518, 96
    %v521 = vpop.permute.xlu0 %520
    %v523 = vadd.f32 %v513, %v521
    %v524 = vtanh.pop %v523
    %526 = vrot.lane.b32.xlu0 %v524, 64
    %v527 = vpop.permute.xlu0 %526
    %v529 = vmul.f32 %v511, %v527
    %s530 = scalar_lea.vmem [#allocation2], 16
    %v531 = vld [vmem:[%s530] sm:$0xff]
    %533 = vrot.lane.b32.xlu0 %v529, 64
    %v534 = vpop.permute.xlu0 %533
    %v535 = vsel %vm432, %v534, 0
    %537 = vmatpush.msra.mxu0 0.0
    %538 = vmatpush.msra.mxu0 0.0
    %539 = vmatpush.msra.mxu0 0.0
    %540 = vmatpush.msra.mxu0 0.0
    %541 = vmatpush.msra.mxu0 0.0
    %542 = vmatpush.msra.mxu0 0.0
    %543 = vmatpush.msra.mxu0 0.0
    %544 = vmatpush.msra.mxu0 0.0
    %545 = vmatpush.msra.mxu0 0.0
    %546 = vmatpush.msra.mxu0 0.0
    %547 = vmatpush.msra.mxu0 0.0
    %548 = vmatpush.msra.mxu0 0.0
    %549 = vmatpush.msra.mxu0 %v371
    %550 = vmatpush.msra.mxu0 %v370
    %551 = vmatpush.msra.mxu0 %v369
    %552 = vmatpush.msra.mxu0 %v368
    %553 = vmatmul.f32.gmra.mxu0 %v535
    %v554 = vpop.f32.mrf.mxu0
    %v555 = vadd.f32 0.0, %v554
    %556 = vdwg.mxu0
    %v557 = vadd.f32 %v531, %v555
    %v559 = vsel %vm432, %v523, 0
    %561 = vmatpush.msra.mxu0 0.0
    %562 = vmatpush.msra.mxu0 0.0
    %563 = vmatpush.msra.mxu0 0.0
    %564 = vmatpush.msra.mxu0 0.0
    %565 = vmatpush.msra.mxu0 0.0
    %566 = vmatpush.msra.mxu0 0.0
    %567 = vmatpush.msra.mxu0 0.0
    %568 = vmatpush.msra.mxu0 0.0
    %569 = vmatpush.msra.mxu0 0.0
    %570 = vmatpush.msra.mxu0 0.0
    %571 = vmatpush.msra.mxu0 0.0
    %572 = vmatpush.msra.mxu0 0.0
    %573 = vmatpush.msra.mxu0 %v375
    %574 = vmatpush.msra.mxu0 %v374
    %575 = vmatpush.msra.mxu0 %v373
    %576 = vmatpush.msra.mxu0 %v372
    %577 = vmatmul.f32.gmra.mxu0 %v559
    %v578 = vpop.f32.mrf.mxu0
    %v579 = vadd.f32 %v457, %v578
    %580 = vdwg.mxu0
    %v581 = vtanh.pop %v579
    %s582 = scalar_lea.vmem %s1, 16
    %v583 = vld [vmem:[%s582] sm:$0xff]
    %v584 = vsub.f32 %v583, 1.0
    %586 = vset.pattern.permute.xlu0 0
    %587 = vperm.xlu0 %586, %v584
    %v588 = vpop.permute.xlu0 %587
    %v590 = vmul.f32 %v581, %v588
    %v591 = vadd.f32 %v523, %v590
    %v592 = vxor.u32 %v557, 2147483648
    %v593 = vmul.f32 %v592, 1.442695
    %v594 = vpow.pop %v593
    %v595 = vadd.f32 %v594, 1.0
    %v596 = vrcp.pop %v595
    %v597 = vmul.f32 %v595, %v596
    %v598 = vsub.f32 1.0, %v597
    %v599 = vmul.f32 %v596, %v598
    %v600 = vadd.f32 %v596, %v599
    %vm601 = vweird.f32 %v595
    %vm602 = vweird.f32 %v596
    %vm603 = vmor %vm601, %vm602
    %v604 = vsel %vm603, %v596, %v600
    %v605 = vand.u32 2147483647, %v595
    %vm606 = vcmp.eq.f32.partialorder %v605, 8.507059e+37
    %v607 = vand.u32 %v595, 2147483648
    %v608 = vor.u32 1.1754944e-38, %v607
    %v609 = vsel %vm606, %v608, %v604
    %v610 = vmul.f32 1.0, %v609
    %v611 = vtanh.pop %v557
    %v612 = vmul.f32 %v610, %v591
    %614 = vrot.lane.b32.xlu0 %v611, 64
    %v615 = vpop.permute.xlu0 %614
    %v617 = vmul.f32 %v610, %v615
    %619 = vrot.lane.b32.xlu0 %v617, 96
    %v620 = vpop.permute.xlu0 %619
    %v622 = vadd.f32 %v612, %v620
    %v623 = vtanh.pop %v622
    %625 = vrot.lane.b32.xlu0 %v623, 64
    %v626 = vpop.permute.xlu0 %625
    %v628 = vmul.f32 %v610, %v626
    %s629 = scalar_lea.vmem [#allocation2], 24
    %v630 = vld [vmem:[%s629] sm:$0xff]
    %632 = vrot.lane.b32.xlu0 %v628, 64
    %v633 = vpop.permute.xlu0 %632
    %v634 = vsel %vm432, %v633, 0
    %636 = vmatpush.msra.mxu0 0.0
    %637 = vmatpush.msra.mxu0 0.0
    %638 = vmatpush.msra.mxu0 0.0
    %639 = vmatpush.msra.mxu0 0.0
    %640 = vmatpush.msra.mxu0 0.0
    %641 = vmatpush.msra.mxu0 0.0
    %642 = vmatpush.msra.mxu0 0.0
    %643 = vmatpush.msra.mxu0 0.0
    %644 = vmatpush.msra.mxu0 0.0
    %645 = vmatpush.msra.mxu0 0.0
    %646 = vmatpush.msra.mxu0 0.0
    %647 = vmatpush.msra.mxu0 0.0
    %648 = vmatpush.msra.mxu0 %v371
    %649 = vmatpush.msra.mxu0 %v370
    %650 = vmatpush.msra.mxu0 %v369
    %651 = vmatpush.msra.mxu0 %v368
    %652 = vmatmul.f32.gmra.mxu0 %v634
    %v653 = vpop.f32.mrf.mxu0
    %v654 = vadd.f32 0.0, %v653
    %655 = vdwg.mxu0
    %v656 = vadd.f32 %v630, %v654
    %v658 = vsel %vm432, %v622, 0
    %660 = vmatpush.msra.mxu0 0.0
    %661 = vmatpush.msra.mxu0 0.0
    %662 = vmatpush.msra.mxu0 0.0
    %663 = vmatpush.msra.mxu0 0.0
    %664 = vmatpush.msra.mxu0 0.0
    %665 = vmatpush.msra.mxu0 0.0
    %666 = vmatpush.msra.mxu0 0.0
    %667 = vmatpush.msra.mxu0 0.0
    %668 = vmatpush.msra.mxu0 0.0
    %669 = vmatpush.msra.mxu0 0.0
    %670 = vmatpush.msra.mxu0 0.0
    %671 = vmatpush.msra.mxu0 0.0
    %672 = vmatpush.msra.mxu0 %v375
    %673 = vmatpush.msra.mxu0 %v374
    %674 = vmatpush.msra.mxu0 %v373
    %675 = vmatpush.msra.mxu0 %v372
    %676 = vmatmul.f32.gmra.mxu0 %v658
    %v677 = vpop.f32.mrf.mxu0
    %v678 = vadd.f32 %v457, %v677
    %679 = vdwg.mxu0
    %v680 = vtanh.pop %v678
    %s681 = scalar_lea.vmem %s1, 24
    %v682 = vld [vmem:[%s681] sm:$0xff]
    %v683 = vsub.f32 %v682, 1.0
    %685 = vset.pattern.permute.xlu0 0
    %686 = vperm.xlu0 %685, %v683
    %v687 = vpop.permute.xlu0 %686
    %v689 = vmul.f32 %v680, %v687
    %v690 = vadd.f32 %v622, %v689
    %v691 = vxor.u32 %v656, 2147483648
    %v692 = vmul.f32 %v691, 1.442695
    %v693 = vpow.pop %v692
    %v694 = vadd.f32 %v693, 1.0
    %v695 = vrcp.pop %v694
    %v696 = vmul.f32 %v694, %v695
    %v697 = vsub.f32 1.0, %v696
    %v698 = vmul.f32 %v695, %v697
    %v699 = vadd.f32 %v695, %v698
    %vm700 = vweird.f32 %v694
    %vm701 = vweird.f32 %v695
    %vm702 = vmor %vm700, %vm701
    %v703 = vsel %vm702, %v695, %v699
    %v704 = vand.u32 2147483647, %v694
    %vm705 = vcmp.eq.f32.partialorder %v704, 8.507059e+37
    %v706 = vand.u32 %v694, 2147483648
    %v707 = vor.u32 1.1754944e-38, %v706
    %v708 = vsel %vm705, %v707, %v703
    %v709 = vmul.f32 1.0, %v708
    %v710 = vtanh.pop %v656
    %v711 = vmul.f32 %v709, %v690
    %713 = vrot.lane.b32.xlu0 %v710, 64
    %v714 = vpop.permute.xlu0 %713
    %v716 = vmul.f32 %v709, %v714
    %718 = vrot.lane.b32.xlu0 %v716, 96
    %v719 = vpop.permute.xlu0 %718
    %v721 = vadd.f32 %v711, %v719
    %v722 = vtanh.pop %v721
    %724 = vrot.lane.b32.xlu0 %v722, 64
    %v725 = vpop.permute.xlu0 %724
    %v727 = vmul.f32 %v709, %v725
    %s728 = scalar_lea.vmem [#allocation2], 32
    %v729 = vld [vmem:[%s728] sm:$0xff]
    %731 = vrot.lane.b32.xlu0 %v727, 64
    %v732 = vpop.permute.xlu0 %731
    %v733 = vsel %vm432, %v732, 0
    %735 = vmatpush.msra.mxu0 0.0
    %736 = vmatpush.msra.mxu0 0.0
    %737 = vmatpush.msra.mxu0 0.0
    %738 = vmatpush.msra.mxu0 0.0
    %739 = vmatpush.msra.mxu0 0.0
    %740 = vmatpush.msra.mxu0 0.0
    %741 = vmatpush.msra.mxu0 0.0
    %742 = vmatpush.msra.mxu0 0.0
    %743 = vmatpush.msra.mxu0 0.0
    %744 = vmatpush.msra.mxu0 0.0
    %745 = vmatpush.msra.mxu0 0.0
    %746 = vmatpush.msra.mxu0 0.0
    %747 = vmatpush.msra.mxu0 %v371
    %748 = vmatpush.msra.mxu0 %v370
    %749 = vmatpush.msra.mxu0 %v369
    %750 = vmatpush.msra.mxu0 %v368
    %751 = vmatmul.f32.gmra.mxu0 %v733
    %v752 = vpop.f32.mrf.mxu0
    %v753 = vadd.f32 0.0, %v752
    %754 = vdwg.mxu0
    %v755 = vadd.f32 %v729, %v753
    %v757 = vsel %vm432, %v721, 0
    %759 = vmatpush.msra.mxu0 0.0
    %760 = vmatpush.msra.mxu0 0.0
    %761 = vmatpush.msra.mxu0 0.0
    %762 = vmatpush.msra.mxu0 0.0
    %763 = vmatpush.msra.mxu0 0.0
    %764 = vmatpush.msra.mxu0 0.0
    %765 = vmatpush.msra.mxu0 0.0
    %766 = vmatpush.msra.mxu0 0.0
    %767 = vmatpush.msra.mxu0 0.0
    %768 = vmatpush.msra.mxu0 0.0
    %769 = vmatpush.msra.mxu0 0.0
    %770 = vmatpush.msra.mxu0 0.0
    %771 = vmatpush.msra.mxu0 %v375
    %772 = vmatpush.msra.mxu0 %v374
    %773 = vmatpush.msra.mxu0 %v373
    %774 = vmatpush.msra.mxu0 %v372
    %775 = vmatmul.f32.gmra.mxu0 %v757
    %v776 = vpop.f32.mrf.mxu0
    %v777 = vadd.f32 %v457, %v776
    %778 = vdwg.mxu0
    %v779 = vtanh.pop %v777
    %s780 = scalar_lea.vmem %s1, 32
    %v781 = vld [vmem:[%s780] sm:$0xff]
    %v782 = vsub.f32 %v781, 1.0
    %784 = vset.pattern.permute.xlu0 0
    %785 = vperm.xlu0 %784, %v782
    %v786 = vpop.permute.xlu0 %785
    %v788 = vmul.f32 %v779, %v786
    %v789 = vadd.f32 %v721, %v788
    %v790 = vxor.u32 %v755, 2147483648
    %v791 = vmul.f32 %v790, 1.442695
    %v792 = vpow.pop %v791
    %v793 = vadd.f32 %v792, 1.0
    %v794 = vrcp.pop %v793
    %v795 = vmul.f32 %v793, %v794
    %v796 = vsub.f32 1.0, %v795
    %v797 = vmul.f32 %v794, %v796
    %v798 = vadd.f32 %v794, %v797
    %vm799 = vweird.f32 %v793
    %vm800 = vweird.f32 %v794
    %vm801 = vmor %vm799, %vm800
    %v802 = vsel %vm801, %v794, %v798
    %v803 = vand.u32 2147483647, %v793
    %vm804 = vcmp.eq.f32.partialorder %v803, 8.507059e+37
    %v805 = vand.u32 %v793, 2147483648
    %v806 = vor.u32 1.1754944e-38, %v805
    %v807 = vsel %vm804, %v806, %v802
    %v808 = vmul.f32 1.0, %v807
    %v809 = vtanh.pop %v755
    %v810 = vmul.f32 %v808, %v789
    %812 = vrot.lane.b32.xlu0 %v809, 64
    %v813 = vpop.permute.xlu0 %812
    %v815 = vmul.f32 %v808, %v813
    %817 = vrot.lane.b32.xlu0 %v815, 96
    %v818 = vpop.permute.xlu0 %817
    %v820 = vadd.f32 %v810, %v818
    %v821 = vtanh.pop %v820
    %823 = vrot.lane.b32.xlu0 %v821, 64
    %v824 = vpop.permute.xlu0 %823
    %v826 = vmul.f32 %v808, %v824
    %s827 = scalar_lea.vmem [#allocation2], 40
    %v828 = vld [vmem:[%s827] sm:$0xff]
    %830 = vrot.lane.b32.xlu0 %v826, 64
    %v831 = vpop.permute.xlu0 %830
    %v832 = vsel %vm432, %v831, 0
    %834 = vmatpush.msra.mxu0 0.0
    %835 = vmatpush.msra.mxu0 0.0
    %836 = vmatpush.msra.mxu0 0.0
    %837 = vmatpush.msra.mxu0 0.0
    %838 = vmatpush.msra.mxu0 0.0
    %839 = vmatpush.msra.mxu0 0.0
    %840 = vmatpush.msra.mxu0 0.0
    %841 = vmatpush.msra.mxu0 0.0
    %842 = vmatpush.msra.mxu0 0.0
    %843 = vmatpush.msra.mxu0 0.0
    %844 = vmatpush.msra.mxu0 0.0
    %845 = vmatpush.msra.mxu0 0.0
    %846 = vmatpush.msra.mxu0 %v371
    %847 = vmatpush.msra.mxu0 %v370
    %848 = vmatpush.msra.mxu0 %v369
    %849 = vmatpush.msra.mxu0 %v368
    %850 = vmatmul.f32.gmra.mxu0 %v832
    %v851 = vpop.f32.mrf.mxu0
    %v852 = vadd.f32 0.0, %v851
    %853 = vdwg.mxu0
    %v854 = vadd.f32 %v828, %v852
    %v856 = vsel %vm432, %v820, 0
    %858 = vmatpush.msra.mxu0 0.0
    %859 = vmatpush.msra.mxu0 0.0
    %860 = vmatpush.msra.mxu0 0.0
    %861 = vmatpush.msra.mxu0 0.0
    %862 = vmatpush.msra.mxu0 0.0
    %863 = vmatpush.msra.mxu0 0.0
    %864 = vmatpush.msra.mxu0 0.0
    %865 = vmatpush.msra.mxu0 0.0
    %866 = vmatpush.msra.mxu0 0.0
    %867 = vmatpush.msra.mxu0 0.0
    %868 = vmatpush.msra.mxu0 0.0
    %869 = vmatpush.msra.mxu0 0.0
    %870 = vmatpush.msra.mxu0 %v375
    %871 = vmatpush.msra.mxu0 %v374
    %872 = vmatpush.msra.mxu0 %v373
    %873 = vmatpush.msra.mxu0 %v372
    %874 = vmatmul.f32.gmra.mxu0 %v856
    %v875 = vpop.f32.mrf.mxu0
    %v876 = vadd.f32 %v457, %v875
    %877 = vdwg.mxu0
    %v878 = vtanh.pop %v876
    %s879 = scalar_lea.vmem %s1, 40
    %v880 = vld [vmem:[%s879] sm:$0xff]
    %v881 = vsub.f32 %v880, 1.0
    %883 = vset.pattern.permute.xlu0 0
    %884 = vperm.xlu0 %883, %v881
    %v885 = vpop.permute.xlu0 %884
    %v887 = vmul.f32 %v878, %v885
    %v888 = vadd.f32 %v820, %v887
    %v889 = vxor.u32 %v854, 2147483648
    %v890 = vmul.f32 %v889, 1.442695
    %v891 = vpow.pop %v890
    %v892 = vadd.f32 %v891, 1.0
    %v893 = vrcp.pop %v892
    %v894 = vmul.f32 %v892, %v893
    %v895 = vsub.f32 1.0, %v894
    %v896 = vmul.f32 %v893, %v895
    %v897 = vadd.f32 %v893, %v896
    %vm898 = vweird.f32 %v892
    %vm899 = vweird.f32 %v893
    %vm900 = vmor %vm898, %vm899
    %v901 = vsel %vm900, %v893, %v897
    %v902 = vand.u32 2147483647, %v892
    %vm903 = vcmp.eq.f32.partialorder %v902, 8.507059e+37
    %v904 = vand.u32 %v892, 2147483648
    %v905 = vor.u32 1.1754944e-38, %v904
    %v906 = vsel %vm903, %v905, %v901
    %v907 = vmul.f32 1.0, %v906
    %v908 = vtanh.pop %v854
    %v909 = vmul.f32 %v907, %v888
    %911 = vrot.lane.b32.xlu0 %v908, 64
    %v912 = vpop.permute.xlu0 %911
    %v914 = vmul.f32 %v907, %v912
    %916 = vrot.lane.b32.xlu0 %v914, 96
    %v917 = vpop.permute.xlu0 %916
    %v919 = vadd.f32 %v909, %v917
    %v920 = vtanh.pop %v919
    %922 = vrot.lane.b32.xlu0 %v920, 64
    %v923 = vpop.permute.xlu0 %922
    %v925 = vmul.f32 %v907, %v923
    %s926 = scalar_lea.vmem [#allocation2], 48
    %v927 = vld [vmem:[%s926] sm:$0xff]
    %929 = vrot.lane.b32.xlu0 %v925, 64
    %v930 = vpop.permute.xlu0 %929
    %v931 = vsel %vm432, %v930, 0
    %933 = vmatpush.msra.mxu0 0.0
    %934 = vmatpush.msra.mxu0 0.0
    %935 = vmatpush.msra.mxu0 0.0
    %936 = vmatpush.msra.mxu0 0.0
    %937 = vmatpush.msra.mxu0 0.0
    %938 = vmatpush.msra.mxu0 0.0
    %939 = vmatpush.msra.mxu0 0.0
    %940 = vmatpush.msra.mxu0 0.0
    %941 = vmatpush.msra.mxu0 0.0
    %942 = vmatpush.msra.mxu0 0.0
    %943 = vmatpush.msra.mxu0 0.0
    %944 = vmatpush.msra.mxu0 0.0
    %945 = vmatpush.msra.mxu0 %v371
    %946 = vmatpush.msra.mxu0 %v370
    %947 = vmatpush.msra.mxu0 %v369
    %948 = vmatpush.msra.mxu0 %v368
    %949 = vmatmul.f32.gmra.mxu0 %v931
    %v950 = vpop.f32.mrf.mxu0
    %v951 = vadd.f32 0.0, %v950
    %952 = vdwg.mxu0
    %v953 = vadd.f32 %v927, %v951
    %v955 = vsel %vm432, %v919, 0
    %957 = vmatpush.msra.mxu0 0.0
    %958 = vmatpush.msra.mxu0 0.0
    %959 = vmatpush.msra.mxu0 0.0
    %960 = vmatpush.msra.mxu0 0.0
    %961 = vmatpush.msra.mxu0 0.0
    %962 = vmatpush.msra.mxu0 0.0
    %963 = vmatpush.msra.mxu0 0.0
    %964 = vmatpush.msra.mxu0 0.0
    %965 = vmatpush.msra.mxu0 0.0
    %966 = vmatpush.msra.mxu0 0.0
    %967 = vmatpush.msra.mxu0 0.0
    %968 = vmatpush.msra.mxu0 0.0
    %969 = vmatpush.msra.mxu0 %v375
    %970 = vmatpush.msra.mxu0 %v374
    %971 = vmatpush.msra.mxu0 %v373
    %972 = vmatpush.msra.mxu0 %v372
    %973 = vmatmul.f32.gmra.mxu0 %v955
    %v974 = vpop.f32.mrf.mxu0
    %v975 = vadd.f32 %v457, %v974
    %976 = vdwg.mxu0
    %v977 = vtanh.pop %v975
    %s978 = scalar_lea.vmem %s1, 48
    %v979 = vld [vmem:[%s978] sm:$0xff]
    %v980 = vsub.f32 %v979, 1.0
    %982 = vset.pattern.permute.xlu0 0
    %983 = vperm.xlu0 %982, %v980
    %v984 = vpop.permute.xlu0 %983
    %v986 = vmul.f32 %v977, %v984
    %v987 = vadd.f32 %v919, %v986
    %v988 = vxor.u32 %v953, 2147483648
    %v989 = vmul.f32 %v988, 1.442695
    %v990 = vpow.pop %v989
    %v991 = vadd.f32 %v990, 1.0
    %v992 = vrcp.pop %v991
    %v993 = vmul.f32 %v991, %v992
    %v994 = vsub.f32 1.0, %v993
    %v995 = vmul.f32 %v992, %v994
    %v996 = vadd.f32 %v992, %v995
    %vm997 = vweird.f32 %v991
    %vm998 = vweird.f32 %v992
    %vm999 = vmor %vm997, %vm998
    %v1000 = vsel %vm999, %v992, %v996
    %v1001 = vand.u32 2147483647, %v991
    %vm1002 = vcmp.eq.f32.partialorder %v1001, 8.507059e+37
    %v1003 = vand.u32 %v991, 2147483648
    %v1004 = vor.u32 1.1754944e-38, %v1003
    %v1005 = vsel %vm1002, %v1004, %v1000
    %v1006 = vmul.f32 1.0, %v1005
    %v1007 = vtanh.pop %v953
    %v1008 = vmul.f32 %v1006, %v987
    %1010 = vrot.lane.b32.xlu0 %v1007, 64
    %v1011 = vpop.permute.xlu0 %1010
    %v1013 = vmul.f32 %v1006, %v1011
    %1015 = vrot.lane.b32.xlu0 %v1013, 96
    %v1016 = vpop.permute.xlu0 %1015
    %v1018 = vadd.f32 %v1008, %v1016
    %v1019 = vtanh.pop %v1018
    %1021 = vrot.lane.b32.xlu0 %v1019, 64
    %v1022 = vpop.permute.xlu0 %1021
    %v1024 = vmul.f32 %v1006, %v1022
    %s1025 = scalar_lea.vmem [#allocation2], 56
    %v1026 = vld [vmem:[%s1025] sm:$0xff]
    %1028 = vrot.lane.b32.xlu0 %v1024, 64
    %v1029 = vpop.permute.xlu0 %1028
    %v1030 = vsel %vm432, %v1029, 0
    %1032 = vmatpush.msra.mxu0 0.0
    %1033 = vmatpush.msra.mxu0 0.0
    %1034 = vmatpush.msra.mxu0 0.0
    %1035 = vmatpush.msra.mxu0 0.0
    %1036 = vmatpush.msra.mxu0 0.0
    %1037 = vmatpush.msra.mxu0 0.0
    %1038 = vmatpush.msra.mxu0 0.0
    %1039 = vmatpush.msra.mxu0 0.0
    %1040 = vmatpush.msra.mxu0 0.0
    %1041 = vmatpush.msra.mxu0 0.0
    %1042 = vmatpush.msra.mxu0 0.0
    %1043 = vmatpush.msra.mxu0 0.0
    %1044 = vmatpush.msra.mxu0 %v371
    %1045 = vmatpush.msra.mxu0 %v370
    %1046 = vmatpush.msra.mxu0 %v369
    %1047 = vmatpush.msra.mxu0 %v368
    %1048 = vmatmul.f32.gmra.mxu0 %v1030
    %v1049 = vpop.f32.mrf.mxu0
    %v1050 = vadd.f32 0.0, %v1049
    %1051 = vdwg.mxu0
    %v1052 = vadd.f32 %v1026, %v1050
    %v1054 = vsel %vm432, %v1018, 0
    %1056 = vmatpush.msra.mxu0 0.0
    %1057 = vmatpush.msra.mxu0 0.0
    %1058 = vmatpush.msra.mxu0 0.0
    %1059 = vmatpush.msra.mxu0 0.0
    %1060 = vmatpush.msra.mxu0 0.0
    %1061 = vmatpush.msra.mxu0 0.0
    %1062 = vmatpush.msra.mxu0 0.0
    %1063 = vmatpush.msra.mxu0 0.0
    %1064 = vmatpush.msra.mxu0 0.0
    %1065 = vmatpush.msra.mxu0 0.0
    %1066 = vmatpush.msra.mxu0 0.0
    %1067 = vmatpush.msra.mxu0 0.0
    %1068 = vmatpush.msra.mxu0 %v375
    %1069 = vmatpush.msra.mxu0 %v374
    %1070 = vmatpush.msra.mxu0 %v373
    %1071 = vmatpush.msra.mxu0 %v372
    %1072 = vmatmul.f32.gmra.mxu0 %v1054
    %v1073 = vpop.f32.mrf.mxu0
    %v1074 = vadd.f32 %v457, %v1073
    %1075 = vdwg.mxu0
    %v1076 = vtanh.pop %v1074
    %s1077 = scalar_lea.vmem %s1, 56
    %v1078 = vld [vmem:[%s1077] sm:$0xff]
    %v1079 = vsub.f32 %v1078, 1.0
    %1081 = vset.pattern.permute.xlu0 0
    %1082 = vperm.xlu0 %1081, %v1079
    %v1083 = vpop.permute.xlu0 %1082
    %v1085 = vmul.f32 %v1076, %v1083
    %v1086 = vadd.f32 %v1018, %v1085
    %v1087 = vxor.u32 %v1052, 2147483648
    %v1088 = vmul.f32 %v1087, 1.442695
    %v1089 = vpow.pop %v1088
    %v1090 = vadd.f32 %v1089, 1.0
    %v1091 = vrcp.pop %v1090
    %v1092 = vmul.f32 %v1090, %v1091
    %v1093 = vsub.f32 1.0, %v1092
    %v1094 = vmul.f32 %v1091, %v1093
    %v1095 = vadd.f32 %v1091, %v1094
    %vm1096 = vweird.f32 %v1090
    %vm1097 = vweird.f32 %v1091
    %vm1098 = vmor %vm1096, %vm1097
    %v1099 = vsel %vm1098, %v1091, %v1095
    %v1100 = vand.u32 2147483647, %v1090
    %vm1101 = vcmp.eq.f32.partialorder %v1100, 8.507059e+37
    %v1102 = vand.u32 %v1090, 2147483648
    %v1103 = vor.u32 1.1754944e-38, %v1102
    %v1104 = vsel %vm1101, %v1103, %v1099
    %v1105 = vmul.f32 1.0, %v1104
    %v1106 = vtanh.pop %v1052
    %v1107 = vmul.f32 %v1105, %v1086
    %1109 = vrot.lane.b32.xlu0 %v1106, 64
    %v1110 = vpop.permute.xlu0 %1109
    %v1112 = vmul.f32 %v1105, %v1110
    %1114 = vrot.lane.b32.xlu0 %v1112, 96
    %v1115 = vpop.permute.xlu0 %1114
    %v1117 = vadd.f32 %v1107, %v1115
    %v1118 = vtanh.pop %v1117
    %1120 = vrot.lane.b32.xlu0 %v1118, 64
    %v1121 = vpop.permute.xlu0 %1120
    %v1123 = vmul.f32 %v1105, %v1121
    %v1124 = vmax.f32 %v1123, 0.0
    %v1125 = vld [vmem:[%s7] sm:$0xff]
    %v1126 = vld [vmem:[%s7 + $0x8] sm:$0xff]
    %v1127 = vld [vmem:[%s7 + $0x10] sm:$0xff]
    %v1128 = vld [vmem:[%s7 + $0x18] sm:$0xff]
    %v1129 = vld [vmem:[%s8] sm:$0x1]
    %v1131 = vperm.slane %v1129, 0
    %1134 = vrot.lane.b32.xlu0 %v1124, 64
    %v1135 = vpop.permute.xlu0 %1134
    %v1136 = vsel %vm432, %v1135, 0
    %1138 = vmatpush.msra.mxu0 0.0
    %1139 = vmatpush.msra.mxu0 0.0
    %1140 = vmatpush.msra.mxu0 0.0
    %1141 = vmatpush.msra.mxu0 0.0
    %1142 = vmatpush.msra.mxu0 0.0
    %1143 = vmatpush.msra.mxu0 0.0
    %1144 = vmatpush.msra.mxu0 0.0
    %1145 = vmatpush.msra.mxu0 0.0
    %1146 = vmatpush.msra.mxu0 0.0
    %1147 = vmatpush.msra.mxu0 0.0
    %1148 = vmatpush.msra.mxu0 0.0
    %1149 = vmatpush.msra.mxu0 0.0
    %1150 = vmatpush.msra.mxu0 %v1128
    %1151 = vmatpush.msra.mxu0 %v1127
    %1152 = vmatpush.msra.mxu0 %v1126
    %1153 = vmatpush.msra.mxu0 %v1125
    %1154 = vmatmul.f32.gmra.mxu0 %v1136
    %v1155 = vpop.f32.mrf.mxu0
    %v1156 = vadd.f32 %v1131, %v1155
    %1157 = vdwg.mxu0
    %vm1158 = vcmask 15360
    %1159 = vst.msk [vmem:[%s9] sm:$0xff] %vm1158, %v1156
    // Predicated region
    $region46: #{tpu_custom_call.1} parent=1 // pred_check
      _
    $region47: #{tpu_custom_call.1} parent=1 // pred_check_branch
      %1161 = sbr.rel (0) target = $region49
    $region48: #{tpu_custom_call.1} parent=1 // pred_region
      _
    $region49: #{tpu_custom_call.1} parent=1 // pred_fallthru
      _
    // Predicated region
    $region50: #{tpu_custom_call.1} parent=1 // pred_check
      _
    $region51: #{tpu_custom_call.1} parent=1 // pred_check_branch
      %1163 = sbr.rel (0) target = $region53
    $region52: #{tpu_custom_call.1} parent=1 // pred_region
      _
    $region53: #{tpu_custom_call.1} parent=1 // pred_fallthru
      _
    %1164 = vsyncpa [#allocation4], 1
    %1165 = vsyncpa [#allocation6], 1

</llo_original>
